<compile_context>
chip_gen: v7x
topology: tpu7x:2x2x1
jax: 0.10.0
libtpu: 0.0.40
codegen_flags: <defaults>
</compile_context>

<pallas_src>
import functools

import jax
import jax.numpy as jnp
from jax.experimental import pallas as pl
from jax.experimental.pallas import tpu as pltpu

EPS = 1e-5


def _round_up(x, m):
    return (x + m - 1) // m * m


# ------------------------------- fused kernel ------------------------------- #

def _basic_block_kernel(x_ref, yy_ref, xx_ref, w1_ref, s1_ref, b1_ref,
                        w2_ref, s2_ref, b2_ref, *rest,
                        H, W, planes, has_proj):
    """One batch element: conv3x3+BN+ReLU -> conv3x3+BN -> +shortcut -> ReLU.

    x_ref:  (1, cin_p, H*W)  f32, channel-padded input (spatial on lanes)
    w1_ref: (cmid_p, 9*cin_p) bf16  flattened 3x3 weights (tap-major, channel-minor)
    w2_ref: (planes, 9*cmid_p) bf16
    s*/b*:  (C, 1) f32 folded BatchNorm scale / bias
    wsc/ssc/bsc (optional): 1x1 projection shortcut (+ folded BN)
    """
    if has_proj:
        wsc_ref, ssc_ref, bsc_ref, out_ref = rest
    else:
        (out_ref,) = rest

    HW = H * W
    x = x_ref[0]                      # (cin_p, HW) f32
    yy = yy_ref[...]                  # (1, HW) int32: row index of each flat position
    xx = xx_ref[...]                  # (1, HW) int32: col index of each flat position

    # Border-validity mask + flat shift for each of the 9 taps (computed once,
    # reused for both convolutions).
    taps = []
    for dy in (-1, 0, 1):
        for dx in (-1, 0, 1):
            valid = ((yy + dy >= 0) & (yy + dy < H) &
                     (xx + dx >= 0) & (xx + dx < W))
            taps.append((dy * W + dx, valid))

    def im2col(img):
        # img: (C, HW) f32 -> (9*C, HW) f32 ; tap t wants img[flat + shift_t]
        slabs = []
        for shift, valid in taps:
            amt = (-shift) % HW
            rolled = img if amt == 0 else pltpu.roll(img, shift=amt, axis=1)
            slabs.append(jnp.where(valid, rolled, 0.0))
        return jnp.concatenate(slabs, axis=0)

    # ---- conv1 (3x3, pad=1) + BN + ReLU : one MXU matmul, K = 9*cin_p ----
    p1 = im2col(x).astype(jnp.bfloat16)                       # (9*cin_p, HW)
    h = jnp.dot(w1_ref[...], p1, preferred_element_type=jnp.float32)
    h = jnp.maximum(h * s1_ref[...] + b1_ref[...], 0.0)       # (cmid_p, HW) f32

    # ---- conv2 (3x3, pad=1) + BN : one MXU matmul, K = 9*cmid_p ----
    p2 = im2col(h).astype(jnp.bfloat16)                       # (9*cmid_p, HW)
    y = jnp.dot(w2_ref[...], p2, preferred_element_type=jnp.float32)
    y = y * s2_ref[...] + b2_ref[...]                         # (planes, HW) f32

    # ---- shortcut from the already-resident x (no extra HBM pass) ----
    if has_proj:
        sc = jnp.dot(wsc_ref[...], x.astype(jnp.bfloat16),
                     preferred_element_type=jnp.float32)
        sc = sc * ssc_ref[...] + bsc_ref[...]                 # (planes, HW)
    else:
        sc = x[0:planes, :]

    out_ref[0] = jnp.maximum(y + sc, 0.0).astype(out_ref.dtype)


# ------------------------------ host-side prep ------------------------------ #

def make_basic_block_params(key, in_planes, planes):
    """Deterministic synthetic parameters (shapes follow nn.Module.__init__)."""
    ks = jax.random.split(key, 16)

    def bn_fold(kg, kb, km, kv, c):
        gamma = 1.0 + 0.1 * jax.random.normal(kg, (c,), jnp.float32)
        beta = 0.1 * jax.random.normal(kb, (c,), jnp.float32)
        mean = 0.1 * jax.random.normal(km, (c,), jnp.float32)
        var = jnp.abs(jax.random.normal(kv, (c,), jnp.float32)) + 0.5
        scale = gamma / jnp.sqrt(var + EPS)
        bias = beta - mean * scale
        return scale, bias

    p = {}
    p["w1"] = 0.1 * jax.random.normal(ks[0], (3, 3, in_planes, planes), jnp.float32)
    p["scale1"], p["bias1"] = bn_fold(ks[1], ks[2], ks[3], ks[4], planes)
    p["w2"] = 0.1 * jax.random.normal(ks[5], (3, 3, planes, planes), jnp.float32)
    p["scale2"], p["bias2"] = bn_fold(ks[6], ks[7], ks[8], ks[9], planes)
    if in_planes != planes:  # stride fixed at 1 here
        p["w_sc"] = 0.1 * jax.random.normal(ks[10], (in_planes, planes), jnp.float32)
        p["scale_sc"], p["bias_sc"] = bn_fold(ks[11], ks[12], ks[13], ks[14], planes)
    return p


def prepare_block(params, in_planes, planes):
    """One-time weight repack: pad channels to multiples of 8, flatten 3x3 taps into
    the contraction axis, pre-cast matmul weights to bf16 (BN affine stays f32)."""
    cin_p = _round_up(in_planes, 8)
    cmid_p = _round_up(planes, 8)

    def pad_axis(a, axis, new):
        pad = [(0, 0)] * a.ndim
        pad[axis] = (0, new - a.shape[axis])
        return jnp.pad(a, pad)

    # conv1: HWIO (3,3,Cin,Cmid) -> (cmid_p, 9*cin_p), row co, col (ky*3+kx)*cin_p+ci
    w1 = pad_axis(pad_axis(params["w1"], 2, cin_p), 3, cmid_p)
    w1_flat = w1.reshape(9 * cin_p, cmid_p).T.astype(jnp.bfloat16)
    s1 = pad_axis(params["scale1"], 0, cmid_p).reshape(cmid_p, 1).astype(jnp.float32)
    b1 = pad_axis(params["bias1"], 0, cmid_p).reshape(cmid_p, 1).astype(jnp.float32)

    # conv2: HWIO (3,3,Cmid,Cout) -> (planes, 9*cmid_p)
    w2 = pad_axis(params["w2"], 2, cmid_p)
    w2_flat = w2.reshape(9 * cmid_p, planes).T.astype(jnp.bfloat16)
    s2 = params["scale2"].reshape(planes, 1).astype(jnp.float32)
    b2 = params["bias2"].reshape(planes, 1).astype(jnp.float32)

    prep = dict(w1=w1_flat, s1=s1, b1=b1, w2=w2_flat, s2=s2, b2=b2)
    if "w_sc" in params:
        wsc = pad_axis(params["w_sc"], 0, cin_p).T.astype(jnp.bfloat16)  # (planes, cin_p)
        prep["wsc"] = wsc
        prep["ssc"] = params["scale_sc"].reshape(planes, 1).astype(jnp.float32)
        prep["bsc"] = params["bias_sc"].reshape(planes, 1).astype(jnp.float32)
    return prep


def _rep(shape):
    """BlockSpec broadcasting a full (small) operand to every grid program."""
    nd = len(shape)
    return pl.BlockSpec(shape, lambda b: (0,) * nd)


def basic_block_forward(x_nchw, prep):
    """Pallas implementation of BasicBlock.forward (stride=1). NCHW in, NCHW out."""
    N, C, H, W = x_nchw.shape
    HW = H * W
    cmid_p, k1 = prep["w1"].shape
    cin_p = k1 // 9
    planes = prep["w2"].shape[0]
    has_proj = "wsc" in prep

    # Free bitcast to (N, C, H*W); only pads channels when C is not a multiple of 8.
    x = x_nchw.astype(jnp.float32).reshape(N, C, HW)
    if cin_p != C:
        x = jnp.pad(x, ((0, 0), (0, cin_p - C), (0, 0)))

    # Precomputed (row, col) index maps for the halo masks (avoids vector int div/mod
    # inside the kernel).
    idx = jnp.arange(HW, dtype=jnp.int32)
    yy = (idx // W).reshape(1, HW)
    xx = (idx % W).reshape(1, HW)

    operands = [x, yy, xx, prep["w1"], prep["s1"], prep["b1"],
                prep["w2"], prep["s2"], prep["b2"]]
    in_specs = [
        pl.BlockSpec((1, cin_p, HW), lambda b: (b, 0, 0)),
        _rep((1, HW)), _rep((1, HW)),
        _rep(prep["w1"].shape), _rep(prep["s1"].shape), _rep(prep["b1"].shape),
        _rep(prep["w2"].shape), _rep(prep["s2"].shape), _rep(prep["b2"].shape),
    ]
    if has_proj:
        operands += [prep["wsc"], prep["ssc"], prep["bsc"]]
        in_specs += [_rep(prep["wsc"].shape), _rep(prep["ssc"].shape),
                     _rep(prep["bsc"].shape)]

    kern = functools.partial(_basic_block_kernel, H=H, W=W,
                             planes=planes, has_proj=has_proj)

    out = pl.pallas_call(
        kern,
        out_shape=jax.ShapeDtypeStruct((N, planes, HW), jnp.float32),
        grid=(N,),
        in_specs=in_specs,
        out_specs=pl.BlockSpec((1, planes, HW), lambda b: (b, 0, 0)),
        compiler_params=pltpu.CompilerParams(
            dimension_semantics=("parallel",),
            vmem_limit_bytes=32 * 1024 * 1024),
    )(*operands)
    return out.reshape(N, planes, H, W)       # free bitcast back to NCHW


# ------------------------------ reference (glue) ---------------------------- #

def basic_block_reference(x_nchw, params):
    """Pure-JAX f32 reference (lax.conv) used only to validate the Pallas kernel."""
    dn = ("NCHW", "HWIO", "NCHW")
    x = x_nchw.astype(jnp.float32)

    def bn(y, scale, bias):
        return y * scale.reshape(1, -1, 1, 1) + bias.reshape(1, -1, 1, 1)

    y = jax.lax.conv_general_dilated(x, params["w1"], (1, 1), "SAME",
                                     dimension_numbers=dn)
    y = jnp.maximum(bn(y, params["scale1"], params["bias1"]), 0.0)
    z = jax.lax.conv_general_dilated(y, params["w2"], (1, 1), "SAME",
                                     dimension_numbers=dn)
    z = bn(z, params["scale2"], params["bias2"])
    if "w_sc" in params:
        w_sc = params["w_sc"].reshape(1, 1, *params["w_sc"].shape)
        sc = jax.lax.conv_general_dilated(x, w_sc, (1, 1), "SAME",
                                          dimension_numbers=dn)
        sc = bn(sc, params["scale_sc"], params["bias_sc"])
    else:
        sc = x
    return jnp.maximum(z + sc, 0.0)


if __name__ == "__main__":
    key = jax.random.PRNGKey(0)
    k_x1, k_p1, k_x2, k_p2 = jax.random.split(key, 4)

    # bf16 MXU inputs with f32 accumulation -> tolerance accounts for bf16 rounding.
    RTOL = ATOL = 2e-2

    # Case 1: in_planes != planes -> 1x1 projection shortcut (the module's test path).
    N, in_planes, planes, H, W = 2, 4, 8, 16, 16
    x1 = jax.random.normal(k_x1, (N, in_planes, H, W), jnp.float32)   # NCHW input
    params1 = make_basic_block_params(k_p1, in_planes, planes)
    prep1 = prepare_block(params1, in_planes, planes)

    out1 = jax.block_until_ready(basic_block_forward(x1, prep1))
    assert out1.shape == (N, planes, H, W), out1.shape
    ref1 = jax.block_until_ready(basic_block_reference(x1, params1))
    assert jnp.allclose(out1, ref1, rtol=RTOL, atol=ATOL), (
        float(jnp.max(jnp.abs(out1 - ref1))))

    # Case 2: in_planes == planes -> identity shortcut path.
    x2 = jax.random.normal(k_x2, (N, planes, H, W), jnp.float32)
    params2 = make_basic_block_params(k_p2, planes, planes)
    prep2 = prepare_block(params2, planes, planes)

    out2 = jax.block_until_ready(basic_block_forward(x2, prep2))
    assert out2.shape == (N, planes, H, W), out2.shape
    ref2 = jax.block_until_ready(basic_block_reference(x2, params2))
    assert jnp.allclose(out2, ref2, rtol=RTOL, atol=ATOL), (
        float(jnp.max(jnp.abs(out2 - ref2))))

    print("KERNEL_OK")
</pallas_src>

<mosaic_0001>
module attributes {stable_mosaic.version = 11 : i64} {
  func.func @_basic_block_kernel(%arg0: i32, %arg1: memref<1x8x256xf32, #tpu.memory_space<vmem>>, %arg2: memref<1x256xi32, #tpu.memory_space<vmem>>, %arg3: memref<1x256xi32, #tpu.memory_space<vmem>>, %arg4: memref<8x72xbf16, #tpu.memory_space<vmem>>, %arg5: memref<8x1xf32, #tpu.memory_space<vmem>>, %arg6: memref<8x1xf32, #tpu.memory_space<vmem>>, %arg7: memref<8x72xbf16, #tpu.memory_space<vmem>>, %arg8: memref<8x1xf32, #tpu.memory_space<vmem>>, %arg9: memref<8x1xf32, #tpu.memory_space<vmem>>, %arg10: memref<8x8xbf16, #tpu.memory_space<vmem>>, %arg11: memref<8x1xf32, #tpu.memory_space<vmem>>, %arg12: memref<8x1xf32, #tpu.memory_space<vmem>>, %arg13: memref<1x8x256xf32, #tpu.memory_space<vmem>>) attributes {dimension_semantics = [#tpu.dimension_semantics<parallel>], iteration_bounds = array<i64: 2>, scalar_prefetch = 0 : i64, scratch_operands = 0 : i64, tpu.core_type = #tpu.core_type<tc>, window_params = [{transform_indices = @transform_0, window_bounds = array<i64: 1, 8, 256>}, {pipeline_mode = #tpu.pipeline_mode<synchronous>, transform_indices = @transform_1, window_bounds = array<i64: 1, 256>}, {pipeline_mode = #tpu.pipeline_mode<synchronous>, transform_indices = @transform_2, window_bounds = array<i64: 1, 256>}, {pipeline_mode = #tpu.pipeline_mode<synchronous>, transform_indices = @transform_3, window_bounds = array<i64: 8, 72>}, {pipeline_mode = #tpu.pipeline_mode<synchronous>, transform_indices = @transform_4, window_bounds = array<i64: 8, 1>}, {pipeline_mode = #tpu.pipeline_mode<synchronous>, transform_indices = @transform_5, window_bounds = array<i64: 8, 1>}, {pipeline_mode = #tpu.pipeline_mode<synchronous>, transform_indices = @transform_6, window_bounds = array<i64: 8, 72>}, {pipeline_mode = #tpu.pipeline_mode<synchronous>, transform_indices = @transform_7, window_bounds = array<i64: 8, 1>}, {pipeline_mode = #tpu.pipeline_mode<synchronous>, transform_indices = @transform_8, window_bounds = array<i64: 8, 1>}, {pipeline_mode = #tpu.pipeline_mode<synchronous>, transform_indices = @transform_9, window_bounds = array<i64: 8, 8>}, {pipeline_mode = #tpu.pipeline_mode<synchronous>, transform_indices = @transform_10, window_bounds = array<i64: 8, 1>}, {pipeline_mode = #tpu.pipeline_mode<synchronous>, transform_indices = @transform_11, window_bounds = array<i64: 8, 1>}, {transform_indices = @transform_12, window_bounds = array<i64: 1, 8, 256>}]} {
    %c0 = arith.constant 0 : index
    %c0_0 = arith.constant 0 : index
    %c0_1 = arith.constant 0 : index
    %0 = vector.load %arg1[%c0, %c0_0, %c0_1] : memref<1x8x256xf32, #tpu.memory_space<vmem>>, vector<1x8x256xf32>
    %1 = vector.shape_cast %0 : vector<1x8x256xf32> to vector<8x256xf32>
    %c0_2 = arith.constant 0 : index
    %c0_3 = arith.constant 0 : index
    %2 = vector.load %arg2[%c0_2, %c0_3] : memref<1x256xi32, #tpu.memory_space<vmem>>, vector<1x256xi32>
    %c0_4 = arith.constant 0 : index
    %c0_5 = arith.constant 0 : index
    %3 = vector.load %arg3[%c0_4, %c0_5] : memref<1x256xi32, #tpu.memory_space<vmem>>, vector<1x256xi32>
    %c-1_i32 = arith.constant -1 : i32
    %4 = vector.broadcast %c-1_i32 : i32 to vector<1x256xi32>
    %5 = arith.addi %2, %4 : vector<1x256xi32>
    %c0_i32 = arith.constant 0 : i32
    %6 = vector.broadcast %c0_i32 : i32 to vector<1x256xi32>
    %7 = arith.cmpi sge, %5, %6 : vector<1x256xi32>
    %c-1_i32_6 = arith.constant -1 : i32
    %8 = vector.broadcast %c-1_i32_6 : i32 to vector<1x256xi32>
    %9 = arith.addi %2, %8 : vector<1x256xi32>
    %c16_i32 = arith.constant 16 : i32
    %10 = vector.broadcast %c16_i32 : i32 to vector<1x256xi32>
    %11 = arith.cmpi slt, %9, %10 : vector<1x256xi32>
    %12 = arith.andi %7, %11 : vector<1x256xi1>
    %c-1_i32_7 = arith.constant -1 : i32
    %13 = vector.broadcast %c-1_i32_7 : i32 to vector<1x256xi32>
    %14 = arith.addi %3, %13 : vector<1x256xi32>
    %c0_i32_8 = arith.constant 0 : i32
    %15 = vector.broadcast %c0_i32_8 : i32 to vector<1x256xi32>
    %16 = arith.cmpi sge, %14, %15 : vector<1x256xi32>
    %17 = arith.andi %12, %16 : vector<1x256xi1>
    %c-1_i32_9 = arith.constant -1 : i32
    %18 = vector.broadcast %c-1_i32_9 : i32 to vector<1x256xi32>
    %19 = arith.addi %3, %18 : vector<1x256xi32>
    %c16_i32_10 = arith.constant 16 : i32
    %20 = vector.broadcast %c16_i32_10 : i32 to vector<1x256xi32>
    %21 = arith.cmpi slt, %19, %20 : vector<1x256xi32>
    %22 = arith.andi %17, %21 : vector<1x256xi1>
    %c-1_i32_11 = arith.constant -1 : i32
    %23 = vector.broadcast %c-1_i32_11 : i32 to vector<1x256xi32>
    %24 = arith.addi %2, %23 : vector<1x256xi32>
    %c0_i32_12 = arith.constant 0 : i32
    %25 = vector.broadcast %c0_i32_12 : i32 to vector<1x256xi32>
    %26 = arith.cmpi sge, %24, %25 : vector<1x256xi32>
    %c-1_i32_13 = arith.constant -1 : i32
    %27 = vector.broadcast %c-1_i32_13 : i32 to vector<1x256xi32>
    %28 = arith.addi %2, %27 : vector<1x256xi32>
    %c16_i32_14 = arith.constant 16 : i32
    %29 = vector.broadcast %c16_i32_14 : i32 to vector<1x256xi32>
    %30 = arith.cmpi slt, %28, %29 : vector<1x256xi32>
    %31 = arith.andi %26, %30 : vector<1x256xi1>
    %c0_i32_15 = arith.constant 0 : i32
    %32 = vector.broadcast %c0_i32_15 : i32 to vector<1x256xi32>
    %33 = arith.addi %3, %32 : vector<1x256xi32>
    %c0_i32_16 = arith.constant 0 : i32
    %34 = vector.broadcast %c0_i32_16 : i32 to vector<1x256xi32>
    %35 = arith.cmpi sge, %33, %34 : vector<1x256xi32>
    %36 = arith.andi %31, %35 : vector<1x256xi1>
    %c0_i32_17 = arith.constant 0 : i32
    %37 = vector.broadcast %c0_i32_17 : i32 to vector<1x256xi32>
    %38 = arith.addi %3, %37 : vector<1x256xi32>
    %c16_i32_18 = arith.constant 16 : i32
    %39 = vector.broadcast %c16_i32_18 : i32 to vector<1x256xi32>
    %40 = arith.cmpi slt, %38, %39 : vector<1x256xi32>
    %41 = arith.andi %36, %40 : vector<1x256xi1>
    %c-1_i32_19 = arith.constant -1 : i32
    %42 = vector.broadcast %c-1_i32_19 : i32 to vector<1x256xi32>
    %43 = arith.addi %2, %42 : vector<1x256xi32>
    %c0_i32_20 = arith.constant 0 : i32
    %44 = vector.broadcast %c0_i32_20 : i32 to vector<1x256xi32>
    %45 = arith.cmpi sge, %43, %44 : vector<1x256xi32>
    %c-1_i32_21 = arith.constant -1 : i32
    %46 = vector.broadcast %c-1_i32_21 : i32 to vector<1x256xi32>
    %47 = arith.addi %2, %46 : vector<1x256xi32>
    %c16_i32_22 = arith.constant 16 : i32
    %48 = vector.broadcast %c16_i32_22 : i32 to vector<1x256xi32>
    %49 = arith.cmpi slt, %47, %48 : vector<1x256xi32>
    %50 = arith.andi %45, %49 : vector<1x256xi1>
    %c1_i32 = arith.constant 1 : i32
    %51 = vector.broadcast %c1_i32 : i32 to vector<1x256xi32>
    %52 = arith.addi %3, %51 : vector<1x256xi32>
    %c0_i32_23 = arith.constant 0 : i32
    %53 = vector.broadcast %c0_i32_23 : i32 to vector<1x256xi32>
    %54 = arith.cmpi sge, %52, %53 : vector<1x256xi32>
    %55 = arith.andi %50, %54 : vector<1x256xi1>
    %c1_i32_24 = arith.constant 1 : i32
    %56 = vector.broadcast %c1_i32_24 : i32 to vector<1x256xi32>
    %57 = arith.addi %3, %56 : vector<1x256xi32>
    %c16_i32_25 = arith.constant 16 : i32
    %58 = vector.broadcast %c16_i32_25 : i32 to vector<1x256xi32>
    %59 = arith.cmpi slt, %57, %58 : vector<1x256xi32>
    %60 = arith.andi %55, %59 : vector<1x256xi1>
    %c0_i32_26 = arith.constant 0 : i32
    %61 = vector.broadcast %c0_i32_26 : i32 to vector<1x256xi32>
    %62 = arith.addi %2, %61 : vector<1x256xi32>
    %c0_i32_27 = arith.constant 0 : i32
    %63 = vector.broadcast %c0_i32_27 : i32 to vector<1x256xi32>
    %64 = arith.cmpi sge, %62, %63 : vector<1x256xi32>
    %c0_i32_28 = arith.constant 0 : i32
    %65 = vector.broadcast %c0_i32_28 : i32 to vector<1x256xi32>
    %66 = arith.addi %2, %65 : vector<1x256xi32>
    %c16_i32_29 = arith.constant 16 : i32
    %67 = vector.broadcast %c16_i32_29 : i32 to vector<1x256xi32>
    %68 = arith.cmpi slt, %66, %67 : vector<1x256xi32>
    %69 = arith.andi %64, %68 : vector<1x256xi1>
    %c-1_i32_30 = arith.constant -1 : i32
    %70 = vector.broadcast %c-1_i32_30 : i32 to vector<1x256xi32>
    %71 = arith.addi %3, %70 : vector<1x256xi32>
    %c0_i32_31 = arith.constant 0 : i32
    %72 = vector.broadcast %c0_i32_31 : i32 to vector<1x256xi32>
    %73 = arith.cmpi sge, %71, %72 : vector<1x256xi32>
    %74 = arith.andi %69, %73 : vector<1x256xi1>
    %c-1_i32_32 = arith.constant -1 : i32
    %75 = vector.broadcast %c-1_i32_32 : i32 to vector<1x256xi32>
    %76 = arith.addi %3, %75 : vector<1x256xi32>
    %c16_i32_33 = arith.constant 16 : i32
    %77 = vector.broadcast %c16_i32_33 : i32 to vector<1x256xi32>
    %78 = arith.cmpi slt, %76, %77 : vector<1x256xi32>
    %79 = arith.andi %74, %78 : vector<1x256xi1>
    %c0_i32_34 = arith.constant 0 : i32
    %80 = vector.broadcast %c0_i32_34 : i32 to vector<1x256xi32>
    %81 = arith.addi %2, %80 : vector<1x256xi32>
    %c0_i32_35 = arith.constant 0 : i32
    %82 = vector.broadcast %c0_i32_35 : i32 to vector<1x256xi32>
    %83 = arith.cmpi sge, %81, %82 : vector<1x256xi32>
    %c0_i32_36 = arith.constant 0 : i32
    %84 = vector.broadcast %c0_i32_36 : i32 to vector<1x256xi32>
    %85 = arith.addi %2, %84 : vector<1x256xi32>
    %c16_i32_37 = arith.constant 16 : i32
    %86 = vector.broadcast %c16_i32_37 : i32 to vector<1x256xi32>
    %87 = arith.cmpi slt, %85, %86 : vector<1x256xi32>
    %88 = arith.andi %83, %87 : vector<1x256xi1>
    %c0_i32_38 = arith.constant 0 : i32
    %89 = vector.broadcast %c0_i32_38 : i32 to vector<1x256xi32>
    %90 = arith.addi %3, %89 : vector<1x256xi32>
    %c0_i32_39 = arith.constant 0 : i32
    %91 = vector.broadcast %c0_i32_39 : i32 to vector<1x256xi32>
    %92 = arith.cmpi sge, %90, %91 : vector<1x256xi32>
    %93 = arith.andi %88, %92 : vector<1x256xi1>
    %c0_i32_40 = arith.constant 0 : i32
    %94 = vector.broadcast %c0_i32_40 : i32 to vector<1x256xi32>
    %95 = arith.addi %3, %94 : vector<1x256xi32>
    %c16_i32_41 = arith.constant 16 : i32
    %96 = vector.broadcast %c16_i32_41 : i32 to vector<1x256xi32>
    %97 = arith.cmpi slt, %95, %96 : vector<1x256xi32>
    %98 = arith.andi %93, %97 : vector<1x256xi1>
    %c0_i32_42 = arith.constant 0 : i32
    %99 = vector.broadcast %c0_i32_42 : i32 to vector<1x256xi32>
    %100 = arith.addi %2, %99 : vector<1x256xi32>
    %c0_i32_43 = arith.constant 0 : i32
    %101 = vector.broadcast %c0_i32_43 : i32 to vector<1x256xi32>
    %102 = arith.cmpi sge, %100, %101 : vector<1x256xi32>
    %c0_i32_44 = arith.constant 0 : i32
    %103 = vector.broadcast %c0_i32_44 : i32 to vector<1x256xi32>
    %104 = arith.addi %2, %103 : vector<1x256xi32>
    %c16_i32_45 = arith.constant 16 : i32
    %105 = vector.broadcast %c16_i32_45 : i32 to vector<1x256xi32>
    %106 = arith.cmpi slt, %104, %105 : vector<1x256xi32>
    %107 = arith.andi %102, %106 : vector<1x256xi1>
    %c1_i32_46 = arith.constant 1 : i32
    %108 = vector.broadcast %c1_i32_46 : i32 to vector<1x256xi32>
    %109 = arith.addi %3, %108 : vector<1x256xi32>
    %c0_i32_47 = arith.constant 0 : i32
    %110 = vector.broadcast %c0_i32_47 : i32 to vector<1x256xi32>
    %111 = arith.cmpi sge, %109, %110 : vector<1x256xi32>
    %112 = arith.andi %107, %111 : vector<1x256xi1>
    %c1_i32_48 = arith.constant 1 : i32
    %113 = vector.broadcast %c1_i32_48 : i32 to vector<1x256xi32>
    %114 = arith.addi %3, %113 : vector<1x256xi32>
    %c16_i32_49 = arith.constant 16 : i32
    %115 = vector.broadcast %c16_i32_49 : i32 to vector<1x256xi32>
    %116 = arith.cmpi slt, %114, %115 : vector<1x256xi32>
    %117 = arith.andi %112, %116 : vector<1x256xi1>
    %c1_i32_50 = arith.constant 1 : i32
    %118 = vector.broadcast %c1_i32_50 : i32 to vector<1x256xi32>
    %119 = arith.addi %2, %118 : vector<1x256xi32>
    %c0_i32_51 = arith.constant 0 : i32
    %120 = vector.broadcast %c0_i32_51 : i32 to vector<1x256xi32>
    %121 = arith.cmpi sge, %119, %120 : vector<1x256xi32>
    %c1_i32_52 = arith.constant 1 : i32
    %122 = vector.broadcast %c1_i32_52 : i32 to vector<1x256xi32>
    %123 = arith.addi %2, %122 : vector<1x256xi32>
    %c16_i32_53 = arith.constant 16 : i32
    %124 = vector.broadcast %c16_i32_53 : i32 to vector<1x256xi32>
    %125 = arith.cmpi slt, %123, %124 : vector<1x256xi32>
    %126 = arith.andi %121, %125 : vector<1x256xi1>
    %c-1_i32_54 = arith.constant -1 : i32
    %127 = vector.broadcast %c-1_i32_54 : i32 to vector<1x256xi32>
    %128 = arith.addi %3, %127 : vector<1x256xi32>
    %c0_i32_55 = arith.constant 0 : i32
    %129 = vector.broadcast %c0_i32_55 : i32 to vector<1x256xi32>
    %130 = arith.cmpi sge, %128, %129 : vector<1x256xi32>
    %131 = arith.andi %126, %130 : vector<1x256xi1>
    %c-1_i32_56 = arith.constant -1 : i32
    %132 = vector.broadcast %c-1_i32_56 : i32 to vector<1x256xi32>
    %133 = arith.addi %3, %132 : vector<1x256xi32>
    %c16_i32_57 = arith.constant 16 : i32
    %134 = vector.broadcast %c16_i32_57 : i32 to vector<1x256xi32>
    %135 = arith.cmpi slt, %133, %134 : vector<1x256xi32>
    %136 = arith.andi %131, %135 : vector<1x256xi1>
    %c1_i32_58 = arith.constant 1 : i32
    %137 = vector.broadcast %c1_i32_58 : i32 to vector<1x256xi32>
    %138 = arith.addi %2, %137 : vector<1x256xi32>
    %c0_i32_59 = arith.constant 0 : i32
    %139 = vector.broadcast %c0_i32_59 : i32 to vector<1x256xi32>
    %140 = arith.cmpi sge, %138, %139 : vector<1x256xi32>
    %c1_i32_60 = arith.constant 1 : i32
    %141 = vector.broadcast %c1_i32_60 : i32 to vector<1x256xi32>
    %142 = arith.addi %2, %141 : vector<1x256xi32>
    %c16_i32_61 = arith.constant 16 : i32
    %143 = vector.broadcast %c16_i32_61 : i32 to vector<1x256xi32>
    %144 = arith.cmpi slt, %142, %143 : vector<1x256xi32>
    %145 = arith.andi %140, %144 : vector<1x256xi1>
    %c0_i32_62 = arith.constant 0 : i32
    %146 = vector.broadcast %c0_i32_62 : i32 to vector<1x256xi32>
    %147 = arith.addi %3, %146 : vector<1x256xi32>
    %c0_i32_63 = arith.constant 0 : i32
    %148 = vector.broadcast %c0_i32_63 : i32 to vector<1x256xi32>
    %149 = arith.cmpi sge, %147, %148 : vector<1x256xi32>
    %150 = arith.andi %145, %149 : vector<1x256xi1>
    %c0_i32_64 = arith.constant 0 : i32
    %151 = vector.broadcast %c0_i32_64 : i32 to vector<1x256xi32>
    %152 = arith.addi %3, %151 : vector<1x256xi32>
    %c16_i32_65 = arith.constant 16 : i32
    %153 = vector.broadcast %c16_i32_65 : i32 to vector<1x256xi32>
    %154 = arith.cmpi slt, %152, %153 : vector<1x256xi32>
    %155 = arith.andi %150, %154 : vector<1x256xi1>
    %c1_i32_66 = arith.constant 1 : i32
    %156 = vector.broadcast %c1_i32_66 : i32 to vector<1x256xi32>
    %157 = arith.addi %2, %156 : vector<1x256xi32>
    %c0_i32_67 = arith.constant 0 : i32
    %158 = vector.broadcast %c0_i32_67 : i32 to vector<1x256xi32>
    %159 = arith.cmpi sge, %157, %158 : vector<1x256xi32>
    %c1_i32_68 = arith.constant 1 : i32
    %160 = vector.broadcast %c1_i32_68 : i32 to vector<1x256xi32>
    %161 = arith.addi %2, %160 : vector<1x256xi32>
    %c16_i32_69 = arith.constant 16 : i32
    %162 = vector.broadcast %c16_i32_69 : i32 to vector<1x256xi32>
    %163 = arith.cmpi slt, %161, %162 : vector<1x256xi32>
    %164 = arith.andi %159, %163 : vector<1x256xi1>
    %c1_i32_70 = arith.constant 1 : i32
    %165 = vector.broadcast %c1_i32_70 : i32 to vector<1x256xi32>
    %166 = arith.addi %3, %165 : vector<1x256xi32>
    %c0_i32_71 = arith.constant 0 : i32
    %167 = vector.broadcast %c0_i32_71 : i32 to vector<1x256xi32>
    %168 = arith.cmpi sge, %166, %167 : vector<1x256xi32>
    %169 = arith.andi %164, %168 : vector<1x256xi1>
    %c1_i32_72 = arith.constant 1 : i32
    %170 = vector.broadcast %c1_i32_72 : i32 to vector<1x256xi32>
    %171 = arith.addi %3, %170 : vector<1x256xi32>
    %c16_i32_73 = arith.constant 16 : i32
    %172 = vector.broadcast %c16_i32_73 : i32 to vector<1x256xi32>
    %173 = arith.cmpi slt, %171, %172 : vector<1x256xi32>
    %174 = arith.andi %169, %173 : vector<1x256xi1>
    %c17_i32 = arith.constant 17 : i32
    %175 = tpu.dynamic_rotate %1 by %c17_i32 dim 1 : vector<8x256xf32>, i32 -> vector<8x256xf32>
    %cst = arith.constant 0.000000e+00 : f32
    %176 = vector.shape_cast %22 : vector<1x256xi1> to vector<1x256xi1>
    %177 = vector.broadcast %176 : vector<1x256xi1> to vector<8x256xi1>
    %178 = vector.broadcast %cst : f32 to vector<8x256xf32>
    %179 = arith.select %177, %175, %178 : vector<8x256xi1>, vector<8x256xf32>
    %c16_i32_74 = arith.constant 16 : i32
    %180 = tpu.dynamic_rotate %1 by %c16_i32_74 dim 1 : vector<8x256xf32>, i32 -> vector<8x256xf32>
    %cst_75 = arith.constant 0.000000e+00 : f32
    %181 = vector.shape_cast %41 : vector<1x256xi1> to vector<1x256xi1>
    %182 = vector.broadcast %181 : vector<1x256xi1> to vector<8x256xi1>
    %183 = vector.broadcast %cst_75 : f32 to vector<8x256xf32>
    %184 = arith.select %182, %180, %183 : vector<8x256xi1>, vector<8x256xf32>
    %c15_i32 = arith.constant 15 : i32
    %185 = tpu.dynamic_rotate %1 by %c15_i32 dim 1 : vector<8x256xf32>, i32 -> vector<8x256xf32>
    %cst_76 = arith.constant 0.000000e+00 : f32
    %186 = vector.shape_cast %60 : vector<1x256xi1> to vector<1x256xi1>
    %187 = vector.broadcast %186 : vector<1x256xi1> to vector<8x256xi1>
    %188 = vector.broadcast %cst_76 : f32 to vector<8x256xf32>
    %189 = arith.select %187, %185, %188 : vector<8x256xi1>, vector<8x256xf32>
    %c1_i32_77 = arith.constant 1 : i32
    %190 = tpu.dynamic_rotate %1 by %c1_i32_77 dim 1 : vector<8x256xf32>, i32 -> vector<8x256xf32>
    %cst_78 = arith.constant 0.000000e+00 : f32
    %191 = vector.shape_cast %79 : vector<1x256xi1> to vector<1x256xi1>
    %192 = vector.broadcast %191 : vector<1x256xi1> to vector<8x256xi1>
    %193 = vector.broadcast %cst_78 : f32 to vector<8x256xf32>
    %194 = arith.select %192, %190, %193 : vector<8x256xi1>, vector<8x256xf32>
    %cst_79 = arith.constant 0.000000e+00 : f32
    %195 = vector.shape_cast %98 : vector<1x256xi1> to vector<1x256xi1>
    %196 = vector.broadcast %195 : vector<1x256xi1> to vector<8x256xi1>
    %197 = vector.broadcast %cst_79 : f32 to vector<8x256xf32>
    %198 = arith.select %196, %1, %197 : vector<8x256xi1>, vector<8x256xf32>
    %c255_i32 = arith.constant 255 : i32
    %199 = tpu.dynamic_rotate %1 by %c255_i32 dim 1 : vector<8x256xf32>, i32 -> vector<8x256xf32>
    %cst_80 = arith.constant 0.000000e+00 : f32
    %200 = vector.shape_cast %117 : vector<1x256xi1> to vector<1x256xi1>
    %201 = vector.broadcast %200 : vector<1x256xi1> to vector<8x256xi1>
    %202 = vector.broadcast %cst_80 : f32 to vector<8x256xf32>
    %203 = arith.select %201, %199, %202 : vector<8x256xi1>, vector<8x256xf32>
    %c241_i32 = arith.constant 241 : i32
    %204 = tpu.dynamic_rotate %1 by %c241_i32 dim 1 : vector<8x256xf32>, i32 -> vector<8x256xf32>
    %cst_81 = arith.constant 0.000000e+00 : f32
    %205 = vector.shape_cast %136 : vector<1x256xi1> to vector<1x256xi1>
    %206 = vector.broadcast %205 : vector<1x256xi1> to vector<8x256xi1>
    %207 = vector.broadcast %cst_81 : f32 to vector<8x256xf32>
    %208 = arith.select %206, %204, %207 : vector<8x256xi1>, vector<8x256xf32>
    %c240_i32 = arith.constant 240 : i32
    %209 = tpu.dynamic_rotate %1 by %c240_i32 dim 1 : vector<8x256xf32>, i32 -> vector<8x256xf32>
    %cst_82 = arith.constant 0.000000e+00 : f32
    %210 = vector.shape_cast %155 : vector<1x256xi1> to vector<1x256xi1>
    %211 = vector.broadcast %210 : vector<1x256xi1> to vector<8x256xi1>
    %212 = vector.broadcast %cst_82 : f32 to vector<8x256xf32>
    %213 = arith.select %211, %209, %212 : vector<8x256xi1>, vector<8x256xf32>
    %c239_i32 = arith.constant 239 : i32
    %214 = tpu.dynamic_rotate %1 by %c239_i32 dim 1 : vector<8x256xf32>, i32 -> vector<8x256xf32>
    %cst_83 = arith.constant 0.000000e+00 : f32
    %215 = vector.shape_cast %174 : vector<1x256xi1> to vector<1x256xi1>
    %216 = vector.broadcast %215 : vector<1x256xi1> to vector<8x256xi1>
    %217 = vector.broadcast %cst_83 : f32 to vector<8x256xf32>
    %218 = arith.select %216, %214, %217 : vector<8x256xi1>, vector<8x256xf32>
    %219 = tpu.concatenate %179, %184, %189, %194, %198, %203, %208, %213, %218 in 0 : vector<8x256xf32>, vector<8x256xf32>, vector<8x256xf32>, vector<8x256xf32>, vector<8x256xf32>, vector<8x256xf32>, vector<8x256xf32>, vector<8x256xf32>, vector<8x256xf32> -> vector<72x256xf32>
    %220 = arith.truncf %219 : vector<72x256xf32> to vector<72x256xbf16>
    %c0_84 = arith.constant 0 : index
    %c0_85 = arith.constant 0 : index
    %221 = vector.load %arg4[%c0_84, %c0_85] : memref<8x72xbf16, #tpu.memory_space<vmem>>, vector<8x72xbf16>
    %cst_86 = arith.constant dense<0.000000e+00> : vector<8x256xf32>
    %222 = tpu.matmul %221, %220, %cst_86 {dimension_numbers = #tpu.dot_dimension_numbers<[1], [0], [0], [1], [0, 0, 1, 1], [], []>} : vector<8x72xbf16>, vector<72x256xbf16>, vector<8x256xf32> -> vector<8x256xf32>
    %c0_87 = arith.constant 0 : index
    %c0_88 = arith.constant 0 : index
    %223 = vector.load %arg5[%c0_87, %c0_88] : memref<8x1xf32, #tpu.memory_space<vmem>>, vector<8x1xf32>
    %224 = vector.broadcast %223 : vector<8x1xf32> to vector<8x256xf32>
    %225 = arith.mulf %222, %224 : vector<8x256xf32>
    %c0_89 = arith.constant 0 : index
    %c0_90 = arith.constant 0 : index
    %226 = vector.load %arg6[%c0_89, %c0_90] : memref<8x1xf32, #tpu.memory_space<vmem>>, vector<8x1xf32>
    %227 = vector.broadcast %226 : vector<8x1xf32> to vector<8x256xf32>
    %228 = arith.addf %225, %227 : vector<8x256xf32>
    %cst_91 = arith.constant 0.000000e+00 : f32
    %229 = vector.broadcast %cst_91 : f32 to vector<8x256xf32>
    %230 = arith.maximumf %228, %229 : vector<8x256xf32>
    %c17_i32_92 = arith.constant 17 : i32
    %231 = tpu.dynamic_rotate %230 by %c17_i32_92 dim 1 : vector<8x256xf32>, i32 -> vector<8x256xf32>
    %cst_93 = arith.constant 0.000000e+00 : f32
    %232 = vector.shape_cast %22 : vector<1x256xi1> to vector<1x256xi1>
    %233 = vector.broadcast %232 : vector<1x256xi1> to vector<8x256xi1>
    %234 = vector.broadcast %cst_93 : f32 to vector<8x256xf32>
    %235 = arith.select %233, %231, %234 : vector<8x256xi1>, vector<8x256xf32>
    %c16_i32_94 = arith.constant 16 : i32
    %236 = tpu.dynamic_rotate %230 by %c16_i32_94 dim 1 : vector<8x256xf32>, i32 -> vector<8x256xf32>
    %cst_95 = arith.constant 0.000000e+00 : f32
    %237 = vector.shape_cast %41 : vector<1x256xi1> to vector<1x256xi1>
    %238 = vector.broadcast %237 : vector<1x256xi1> to vector<8x256xi1>
    %239 = vector.broadcast %cst_95 : f32 to vector<8x256xf32>
    %240 = arith.select %238, %236, %239 : vector<8x256xi1>, vector<8x256xf32>
    %c15_i32_96 = arith.constant 15 : i32
    %241 = tpu.dynamic_rotate %230 by %c15_i32_96 dim 1 : vector<8x256xf32>, i32 -> vector<8x256xf32>
    %cst_97 = arith.constant 0.000000e+00 : f32
    %242 = vector.shape_cast %60 : vector<1x256xi1> to vector<1x256xi1>
    %243 = vector.broadcast %242 : vector<1x256xi1> to vector<8x256xi1>
    %244 = vector.broadcast %cst_97 : f32 to vector<8x256xf32>
    %245 = arith.select %243, %241, %244 : vector<8x256xi1>, vector<8x256xf32>
    %c1_i32_98 = arith.constant 1 : i32
    %246 = tpu.dynamic_rotate %230 by %c1_i32_98 dim 1 : vector<8x256xf32>, i32 -> vector<8x256xf32>
    %cst_99 = arith.constant 0.000000e+00 : f32
    %247 = vector.shape_cast %79 : vector<1x256xi1> to vector<1x256xi1>
    %248 = vector.broadcast %247 : vector<1x256xi1> to vector<8x256xi1>
    %249 = vector.broadcast %cst_99 : f32 to vector<8x256xf32>
    %250 = arith.select %248, %246, %249 : vector<8x256xi1>, vector<8x256xf32>
    %cst_100 = arith.constant 0.000000e+00 : f32
    %251 = vector.shape_cast %98 : vector<1x256xi1> to vector<1x256xi1>
    %252 = vector.broadcast %251 : vector<1x256xi1> to vector<8x256xi1>
    %253 = vector.broadcast %cst_100 : f32 to vector<8x256xf32>
    %254 = arith.select %252, %230, %253 : vector<8x256xi1>, vector<8x256xf32>
    %c255_i32_101 = arith.constant 255 : i32
    %255 = tpu.dynamic_rotate %230 by %c255_i32_101 dim 1 : vector<8x256xf32>, i32 -> vector<8x256xf32>
    %cst_102 = arith.constant 0.000000e+00 : f32
    %256 = vector.shape_cast %117 : vector<1x256xi1> to vector<1x256xi1>
    %257 = vector.broadcast %256 : vector<1x256xi1> to vector<8x256xi1>
    %258 = vector.broadcast %cst_102 : f32 to vector<8x256xf32>
    %259 = arith.select %257, %255, %258 : vector<8x256xi1>, vector<8x256xf32>
    %c241_i32_103 = arith.constant 241 : i32
    %260 = tpu.dynamic_rotate %230 by %c241_i32_103 dim 1 : vector<8x256xf32>, i32 -> vector<8x256xf32>
    %cst_104 = arith.constant 0.000000e+00 : f32
    %261 = vector.shape_cast %136 : vector<1x256xi1> to vector<1x256xi1>
    %262 = vector.broadcast %261 : vector<1x256xi1> to vector<8x256xi1>
    %263 = vector.broadcast %cst_104 : f32 to vector<8x256xf32>
    %264 = arith.select %262, %260, %263 : vector<8x256xi1>, vector<8x256xf32>
    %c240_i32_105 = arith.constant 240 : i32
    %265 = tpu.dynamic_rotate %230 by %c240_i32_105 dim 1 : vector<8x256xf32>, i32 -> vector<8x256xf32>
    %cst_106 = arith.constant 0.000000e+00 : f32
    %266 = vector.shape_cast %155 : vector<1x256xi1> to vector<1x256xi1>
    %267 = vector.broadcast %266 : vector<1x256xi1> to vector<8x256xi1>
    %268 = vector.broadcast %cst_106 : f32 to vector<8x256xf32>
    %269 = arith.select %267, %265, %268 : vector<8x256xi1>, vector<8x256xf32>
    %c239_i32_107 = arith.constant 239 : i32
    %270 = tpu.dynamic_rotate %230 by %c239_i32_107 dim 1 : vector<8x256xf32>, i32 -> vector<8x256xf32>
    %cst_108 = arith.constant 0.000000e+00 : f32
    %271 = vector.shape_cast %174 : vector<1x256xi1> to vector<1x256xi1>
    %272 = vector.broadcast %271 : vector<1x256xi1> to vector<8x256xi1>
    %273 = vector.broadcast %cst_108 : f32 to vector<8x256xf32>
    %274 = arith.select %272, %270, %273 : vector<8x256xi1>, vector<8x256xf32>
    %275 = tpu.concatenate %235, %240, %245, %250, %254, %259, %264, %269, %274 in 0 : vector<8x256xf32>, vector<8x256xf32>, vector<8x256xf32>, vector<8x256xf32>, vector<8x256xf32>, vector<8x256xf32>, vector<8x256xf32>, vector<8x256xf32>, vector<8x256xf32> -> vector<72x256xf32>
    %276 = arith.truncf %275 : vector<72x256xf32> to vector<72x256xbf16>
    %c0_109 = arith.constant 0 : index
    %c0_110 = arith.constant 0 : index
    %277 = vector.load %arg7[%c0_109, %c0_110] : memref<8x72xbf16, #tpu.memory_space<vmem>>, vector<8x72xbf16>
    %cst_111 = arith.constant dense<0.000000e+00> : vector<8x256xf32>
    %278 = tpu.matmul %277, %276, %cst_111 {dimension_numbers = #tpu.dot_dimension_numbers<[1], [0], [0], [1], [0, 0, 1, 1], [], []>} : vector<8x72xbf16>, vector<72x256xbf16>, vector<8x256xf32> -> vector<8x256xf32>
    %c0_112 = arith.constant 0 : index
    %c0_113 = arith.constant 0 : index
    %279 = vector.load %arg8[%c0_112, %c0_113] : memref<8x1xf32, #tpu.memory_space<vmem>>, vector<8x1xf32>
    %280 = vector.broadcast %279 : vector<8x1xf32> to vector<8x256xf32>
    %281 = arith.mulf %278, %280 : vector<8x256xf32>
    %c0_114 = arith.constant 0 : index
    %c0_115 = arith.constant 0 : index
    %282 = vector.load %arg9[%c0_114, %c0_115] : memref<8x1xf32, #tpu.memory_space<vmem>>, vector<8x1xf32>
    %283 = vector.broadcast %282 : vector<8x1xf32> to vector<8x256xf32>
    %284 = arith.addf %281, %283 : vector<8x256xf32>
    %c0_116 = arith.constant 0 : index
    %c0_117 = arith.constant 0 : index
    %285 = vector.load %arg10[%c0_116, %c0_117] : memref<8x8xbf16, #tpu.memory_space<vmem>>, vector<8x8xbf16>
    %286 = arith.truncf %1 : vector<8x256xf32> to vector<8x256xbf16>
    %cst_118 = arith.constant dense<0.000000e+00> : vector<8x256xf32>
    %287 = tpu.matmul %285, %286, %cst_118 {dimension_numbers = #tpu.dot_dimension_numbers<[1], [0], [0], [1], [0, 0, 1, 1], [], []>} : vector<8x8xbf16>, vector<8x256xbf16>, vector<8x256xf32> -> vector<8x256xf32>
    %c0_119 = arith.constant 0 : index
    %c0_120 = arith.constant 0 : index
    %288 = vector.load %arg11[%c0_119, %c0_120] : memref<8x1xf32, #tpu.memory_space<vmem>>, vector<8x1xf32>
    %289 = vector.broadcast %288 : vector<8x1xf32> to vector<8x256xf32>
    %290 = arith.mulf %287, %289 : vector<8x256xf32>
    %c0_121 = arith.constant 0 : index
    %c0_122 = arith.constant 0 : index
    %291 = vector.load %arg12[%c0_121, %c0_122] : memref<8x1xf32, #tpu.memory_space<vmem>>, vector<8x1xf32>
    %292 = vector.broadcast %291 : vector<8x1xf32> to vector<8x256xf32>
    %293 = arith.addf %290, %292 : vector<8x256xf32>
    %294 = arith.addf %284, %293 : vector<8x256xf32>
    %cst_123 = arith.constant 0.000000e+00 : f32
    %295 = vector.broadcast %cst_123 : f32 to vector<8x256xf32>
    %296 = arith.maximumf %294, %295 : vector<8x256xf32>
    %c0_124 = arith.constant 0 : index
    %c0_125 = arith.constant 0 : index
    %c0_126 = arith.constant 0 : index
    %297 = vector.load %arg13[%c0_124, %c0_125, %c0_126] : memref<1x8x256xf32, #tpu.memory_space<vmem>>, vector<1x8x256xf32>
    %298 = vector.shape_cast %297 : vector<1x8x256xf32> to vector<8x256xf32>
    %299 = vector.shape_cast %296 : vector<8x256xf32> to vector<1x8x256xf32>
    tpu.vector_store %arg13[%c0_124, %c0_125, %c0_126], %299 {strides = array<i32>} : memref<1x8x256xf32, #tpu.memory_space<vmem>>, vector<1x8x256xf32>,
    return
  }
  func.func @transform_0(%arg0: i32) -> (i32, i32, i32) {
    %c0_i32 = arith.constant 0 : i32
    %c0_i32_0 = arith.constant 0 : i32
    %c0_i32_1 = arith.constant 0 : i32
    return %arg0, %c0_i32, %c0_i32_0 : i32, i32, i32
  }
  func.func @transform_1(%arg0: i32) -> (i32, i32) {
    %c0_i32 = arith.constant 0 : i32
    %c0_i32_0 = arith.constant 0 : i32
    %c0_i32_1 = arith.constant 0 : i32
    return %c0_i32, %c0_i32_0 : i32, i32
  }
  func.func @transform_2(%arg0: i32) -> (i32, i32) {
    %c0_i32 = arith.constant 0 : i32
    %c0_i32_0 = arith.constant 0 : i32
    %c0_i32_1 = arith.constant 0 : i32
    return %c0_i32, %c0_i32_0 : i32, i32
  }
  func.func @transform_3(%arg0: i32) -> (i32, i32) {
    %c0_i32 = arith.constant 0 : i32
    %c0_i32_0 = arith.constant 0 : i32
    %c0_i32_1 = arith.constant 0 : i32
    return %c0_i32, %c0_i32_0 : i32, i32
  }
  func.func @transform_4(%arg0: i32) -> (i32, i32) {
    %c0_i32 = arith.constant 0 : i32
    %c0_i32_0 = arith.constant 0 : i32
    %c0_i32_1 = arith.constant 0 : i32
    return %c0_i32, %c0_i32_0 : i32, i32
  }
  func.func @transform_5(%arg0: i32) -> (i32, i32) {
    %c0_i32 = arith.constant 0 : i32
    %c0_i32_0 = arith.constant 0 : i32
    %c0_i32_1 = arith.constant 0 : i32
    return %c0_i32, %c0_i32_0 : i32, i32
  }
  func.func @transform_6(%arg0: i32) -> (i32, i32) {
    %c0_i32 = arith.constant 0 : i32
    %c0_i32_0 = arith.constant 0 : i32
    %c0_i32_1 = arith.constant 0 : i32
    return %c0_i32, %c0_i32_0 : i32, i32
  }
  func.func @transform_7(%arg0: i32) -> (i32, i32) {
    %c0_i32 = arith.constant 0 : i32
    %c0_i32_0 = arith.constant 0 : i32
    %c0_i32_1 = arith.constant 0 : i32
    return %c0_i32, %c0_i32_0 : i32, i32
  }
  func.func @transform_8(%arg0: i32) -> (i32, i32) {
    %c0_i32 = arith.constant 0 : i32
    %c0_i32_0 = arith.constant 0 : i32
    %c0_i32_1 = arith.constant 0 : i32
    return %c0_i32, %c0_i32_0 : i32, i32
  }
  func.func @transform_9(%arg0: i32) -> (i32, i32) {
    %c0_i32 = arith.constant 0 : i32
    %c0_i32_0 = arith.constant 0 : i32
    %c0_i32_1 = arith.constant 0 : i32
    return %c0_i32, %c0_i32_0 : i32, i32
  }
  func.func @transform_10(%arg0: i32) -> (i32, i32) {
    %c0_i32 = arith.constant 0 : i32
    %c0_i32_0 = arith.constant 0 : i32
    %c0_i32_1 = arith.constant 0 : i32
    return %c0_i32, %c0_i32_0 : i32, i32
  }
  func.func @transform_11(%arg0: i32) -> (i32, i32) {
    %c0_i32 = arith.constant 0 : i32
    %c0_i32_0 = arith.constant 0 : i32
    %c0_i32_1 = arith.constant 0 : i32
    return %c0_i32, %c0_i32_0 : i32, i32
  }
  func.func @transform_12(%arg0: i32) -> (i32, i32, i32) {
    %c0_i32 = arith.constant 0 : i32
    %c0_i32_0 = arith.constant 0 : i32
    %c0_i32_1 = arith.constant 0 : i32
    return %arg0, %c0_i32, %c0_i32_0 : i32, i32, i32
  }
}

</mosaic_0001>

<llo_original>
// kernel: tpu_custom_call.1
$region0: #{tpu_custom_call.1}
  #allocation0 [shape = 'u32[]', space=smem, size = 0x4, offset = 0x4, fixed_abs, tag = 'smem constant byte address 0x4 - core index']
  #allocation1 [shape = 'u32[144,128]{1,0:T(1,128)}', space=vmem, size = 0x12000, scoped, tag = 'internal scratch']
  %s0 = inlined_call_operand.vmem [shape: f32[2,8,256], index: 0, kind: input, shape index: {}]
  %s1 = inlined_call_operand.vmem [shape: s32[1,256], index: 1, kind: input, shape index: {}]
  %s2 = inlined_call_operand.vmem [shape: s32[1,256], index: 2, kind: input, shape index: {}]
  %s3 = inlined_call_operand.vmem [shape: bf16[8,72], index: 3, kind: input, shape index: {}]
  %s4 = inlined_call_operand.vmem [shape: f32[8,1], index: 4, kind: input, shape index: {}]
  %s5 = inlined_call_operand.vmem [shape: f32[8,1], index: 5, kind: input, shape index: {}]
  %s6 = inlined_call_operand.vmem [shape: bf16[8,72], index: 6, kind: input, shape index: {}]
  %s7 = inlined_call_operand.vmem [shape: f32[8,1], index: 7, kind: input, shape index: {}]
  %s8 = inlined_call_operand.vmem [shape: f32[8,1], index: 8, kind: input, shape index: {}]
  %s9 = inlined_call_operand.vmem [shape: bf16[8,8], index: 9, kind: input, shape index: {}]
  %s10 = inlined_call_operand.vmem [shape: f32[8,1], index: 10, kind: input, shape index: {}]
  %s11 = inlined_call_operand.vmem [shape: f32[8,1], index: 11, kind: input, shape index: {}]
  %s12 = inlined_call_operand.hbm [shape: f32[2,8,256], index: 12, kind: output, shape index: {}]
  %s13 = sld [smem:[#allocation0]]
  $region81: #{tpu_custom_call.1} parent=0
    _
  %s15 = ssub.s32 1, %s13
  %s16 = scalar_select 0, %s15, %s13
  $region1: #{tpu_custom_call.1} parent=0
    #allocation2 [shape = 'u8[16384]{0}', space=vmem, size = 0x4000, scoped, tag = 'output window, operand 0']
    #allocation3 [shape = 's32[2]{0}', space=sflag, size = 0x8, scoped, tag = 'scoped memory for tpu_custom_call.1']
    %17 = vsyncpa [#allocation3], 0
    %s18 = scalar_lea.sflag [#allocation3], 1
    %19 = vsyncpa %s18, 0
    loop: start=0, step=1, limit=4
    $region2: #{tpu_custom_call.1} parent=1 // loop_pre_header
      _
    $region3: #{tpu_custom_call.1} parent=1 // loop_header
      %s21 = sphi 0, %s25
      %p22 = scmp.ge.s32.totalorder %s21, 4
      %s31 = sphi 0, %s33
      %s34 = sphi 0, %s31
      %s35 = sphi 0, %s34
      %s51 = sphi 0, %s35
      %s55 = sphi 0, %s55
      %s57 = sphi 0, %s55
      %s58 = sphi 0, %s57
      %s72 = sphi 0, %s58
      %s76 = sphi 0, %s76
      %s78 = sphi 0, %s76
      %s79 = sphi 0, %s78
      %s93 = sphi 0, %s79
      %s97 = sphi 0, %s97
      %s99 = sphi 0, %s97
      %s100 = sphi 0, %s99
      %s114 = sphi 0, %s100
      %s118 = sphi 0, %s118
      %s120 = sphi 0, %s118
      %s121 = sphi 0, %s120
      %s135 = sphi 0, %s121
      %s139 = sphi 0, %s139
      %s141 = sphi 0, %s139
      %s142 = sphi 0, %s141
      %s156 = sphi 0, %s142
      %s160 = sphi 0, %s160
      %s162 = sphi 0, %s160
      %s163 = sphi 0, %s162
      %s177 = sphi 0, %s163
      %s181 = sphi 0, %s181
      %s183 = sphi 0, %s181
      %s184 = sphi 0, %s183
      %s198 = sphi 0, %s184
      %s202 = sphi 0, %s202
      %s204 = sphi 0, %s202
      %s205 = sphi 0, %s204
      %s219 = sphi 0, %s205
      %s223 = sphi 0, %s223
      %s225 = sphi 0, %s223
      %s226 = sphi 0, %s225
      %s240 = sphi 0, %s226
      %s244 = sphi 0, %s244
      %s246 = sphi 0, %s244
      %s247 = sphi 0, %s246
      %s261 = sphi 0, %s247
      %s265 = sphi 0, %s265
      %s267 = sphi 0, %s265
      %s268 = sphi 0, %s267
      %s282 = sphi 0, %s268
      %s288 = sphi 0, %s290
      %s291 = sphi 0, %s288
      %s292 = sphi 0, %s291
      %s308 = sphi 0, %s292
    $region4: #{tpu_custom_call.1} parent=1 // loop_header_branch
      %24 = sbr.rel (%p22) target = $region8
    $region5: #{tpu_custom_call.1} parent=1 // loop_body
      %s26 = ssub.s32 %s21, 1
      %s27 = ssub.s32 %s21, 2
      %s28 = sadd.s32 %s21, 1
      %s29 = ssub.s32 %s21, %s28
      %p30 = scmp.eq.s32.totalorder %s29, 0
      %s32 = sadd.s32 %s31, 1
      %s33 = scalar_select %p30, %s31, %s32
      %p36 = pneg %p30
      %p37 = scmp.eq.s32.totalorder %s21, 1
      %p38 = por %p36, %p37
      %p39 = scmp.ne.s32.totalorder %s31, %s34
      %p40 = scmp.eq.s32.totalorder %s21, 0
      %p41 = por %p39, %p40
      %p42 = scmp.ne.s32.totalorder %s31, %s34
      %p43 = scmp.eq.s32.totalorder %s26, 1
      %p44 = por %p42, %p43
      %p45 = scmp.ne.s32.totalorder %s34, %s35
      %p46 = scmp.eq.s32.totalorder %s26, 0
      %p47 = por %p45, %p46
      %p48 = scmp.ne.s32.totalorder %s34, %s35
      %p49 = scmp.eq.s32.totalorder %s27, 1
      %p50 = por %p48, %p49
      %p52 = scmp.ne.s32.totalorder %s35, %s51
      %p53 = scmp.eq.s32.totalorder %s27, 0
      %p54 = por %p52, %p53
      %s56 = sadd.s32 %s55, 1
      %p59 = scmp.eq.s32.totalorder %s21, 1
      %p60 = scmp.ne.s32.totalorder %s55, %s57
      %p61 = scmp.eq.s32.totalorder %s21, 0
      %p62 = por %p60, %p61
      %p63 = scmp.ne.s32.totalorder %s55, %s57
      %p64 = scmp.eq.s32.totalorder %s26, 1
      %p65 = por %p63, %p64
      %p66 = scmp.ne.s32.totalorder %s57, %s58
      %p67 = scmp.eq.s32.totalorder %s26, 0
      %p68 = por %p66, %p67
      %p69 = scmp.ne.s32.totalorder %s57, %s58
      %p70 = scmp.eq.s32.totalorder %s27, 1
      %p71 = por %p69, %p70
      %p73 = scmp.ne.s32.totalorder %s58, %s72
      %p74 = scmp.eq.s32.totalorder %s27, 0
      %p75 = por %p73, %p74
      %s77 = sadd.s32 %s76, 1
      %p80 = scmp.eq.s32.totalorder %s21, 1
      %p81 = scmp.ne.s32.totalorder %s76, %s78
      %p82 = scmp.eq.s32.totalorder %s21, 0
      %p83 = por %p81, %p82
      %p84 = scmp.ne.s32.totalorder %s76, %s78
      %p85 = scmp.eq.s32.totalorder %s26, 1
      %p86 = por %p84, %p85
      %p87 = scmp.ne.s32.totalorder %s78, %s79
      %p88 = scmp.eq.s32.totalorder %s26, 0
      %p89 = por %p87, %p88
      %p90 = scmp.ne.s32.totalorder %s78, %s79
      %p91 = scmp.eq.s32.totalorder %s27, 1
      %p92 = por %p90, %p91
      %p94 = scmp.ne.s32.totalorder %s79, %s93
      %p95 = scmp.eq.s32.totalorder %s27, 0
      %p96 = por %p94, %p95
      %s98 = sadd.s32 %s97, 1
      %p101 = scmp.eq.s32.totalorder %s21, 1
      %p102 = scmp.ne.s32.totalorder %s97, %s99
      %p103 = scmp.eq.s32.totalorder %s21, 0
      %p104 = por %p102, %p103
      %p105 = scmp.ne.s32.totalorder %s97, %s99
      %p106 = scmp.eq.s32.totalorder %s26, 1
      %p107 = por %p105, %p106
      %p108 = scmp.ne.s32.totalorder %s99, %s100
      %p109 = scmp.eq.s32.totalorder %s26, 0
      %p110 = por %p108, %p109
      %p111 = scmp.ne.s32.totalorder %s99, %s100
      %p112 = scmp.eq.s32.totalorder %s27, 1
      %p113 = por %p111, %p112
      %p115 = scmp.ne.s32.totalorder %s100, %s114
      %p116 = scmp.eq.s32.totalorder %s27, 0
      %p117 = por %p115, %p116
      %s119 = sadd.s32 %s118, 1
      %p122 = scmp.eq.s32.totalorder %s21, 1
      %p123 = scmp.ne.s32.totalorder %s118, %s120
      %p124 = scmp.eq.s32.totalorder %s21, 0
      %p125 = por %p123, %p124
      %p126 = scmp.ne.s32.totalorder %s118, %s120
      %p127 = scmp.eq.s32.totalorder %s26, 1
      %p128 = por %p126, %p127
      %p129 = scmp.ne.s32.totalorder %s120, %s121
      %p130 = scmp.eq.s32.totalorder %s26, 0
      %p131 = por %p129, %p130
      %p132 = scmp.ne.s32.totalorder %s120, %s121
      %p133 = scmp.eq.s32.totalorder %s27, 1
      %p134 = por %p132, %p133
      %p136 = scmp.ne.s32.totalorder %s121, %s135
      %p137 = scmp.eq.s32.totalorder %s27, 0
      %p138 = por %p136, %p137
      %s140 = sadd.s32 %s139, 1
      %p143 = scmp.eq.s32.totalorder %s21, 1
      %p144 = scmp.ne.s32.totalorder %s139, %s141
      %p145 = scmp.eq.s32.totalorder %s21, 0
      %p146 = por %p144, %p145
      %p147 = scmp.ne.s32.totalorder %s139, %s141
      %p148 = scmp.eq.s32.totalorder %s26, 1
      %p149 = por %p147, %p148
      %p150 = scmp.ne.s32.totalorder %s141, %s142
      %p151 = scmp.eq.s32.totalorder %s26, 0
      %p152 = por %p150, %p151
      %p153 = scmp.ne.s32.totalorder %s141, %s142
      %p154 = scmp.eq.s32.totalorder %s27, 1
      %p155 = por %p153, %p154
      %p157 = scmp.ne.s32.totalorder %s142, %s156
      %p158 = scmp.eq.s32.totalorder %s27, 0
      %p159 = por %p157, %p158
      %s161 = sadd.s32 %s160, 1
      %p164 = scmp.eq.s32.totalorder %s21, 1
      %p165 = scmp.ne.s32.totalorder %s160, %s162
      %p166 = scmp.eq.s32.totalorder %s21, 0
      %p167 = por %p165, %p166
      %p168 = scmp.ne.s32.totalorder %s160, %s162
      %p169 = scmp.eq.s32.totalorder %s26, 1
      %p170 = por %p168, %p169
      %p171 = scmp.ne.s32.totalorder %s162, %s163
      %p172 = scmp.eq.s32.totalorder %s26, 0
      %p173 = por %p171, %p172
      %p174 = scmp.ne.s32.totalorder %s162, %s163
      %p175 = scmp.eq.s32.totalorder %s27, 1
      %p176 = por %p174, %p175
      %p178 = scmp.ne.s32.totalorder %s163, %s177
      %p179 = scmp.eq.s32.totalorder %s27, 0
      %p180 = por %p178, %p179
      %s182 = sadd.s32 %s181, 1
      %p185 = scmp.eq.s32.totalorder %s21, 1
      %p186 = scmp.ne.s32.totalorder %s181, %s183
      %p187 = scmp.eq.s32.totalorder %s21, 0
      %p188 = por %p186, %p187
      %p189 = scmp.ne.s32.totalorder %s181, %s183
      %p190 = scmp.eq.s32.totalorder %s26, 1
      %p191 = por %p189, %p190
      %p192 = scmp.ne.s32.totalorder %s183, %s184
      %p193 = scmp.eq.s32.totalorder %s26, 0
      %p194 = por %p192, %p193
      %p195 = scmp.ne.s32.totalorder %s183, %s184
      %p196 = scmp.eq.s32.totalorder %s27, 1
      %p197 = por %p195, %p196
      %p199 = scmp.ne.s32.totalorder %s184, %s198
      %p200 = scmp.eq.s32.totalorder %s27, 0
      %p201 = por %p199, %p200
      %s203 = sadd.s32 %s202, 1
      %p206 = scmp.eq.s32.totalorder %s21, 1
      %p207 = scmp.ne.s32.totalorder %s202, %s204
      %p208 = scmp.eq.s32.totalorder %s21, 0
      %p209 = por %p207, %p208
      %p210 = scmp.ne.s32.totalorder %s202, %s204
      %p211 = scmp.eq.s32.totalorder %s26, 1
      %p212 = por %p210, %p211
      %p213 = scmp.ne.s32.totalorder %s204, %s205
      %p214 = scmp.eq.s32.totalorder %s26, 0
      %p215 = por %p213, %p214
      %p216 = scmp.ne.s32.totalorder %s204, %s205
      %p217 = scmp.eq.s32.totalorder %s27, 1
      %p218 = por %p216, %p217
      %p220 = scmp.ne.s32.totalorder %s205, %s219
      %p221 = scmp.eq.s32.totalorder %s27, 0
      %p222 = por %p220, %p221
      %s224 = sadd.s32 %s223, 1
      %p227 = scmp.eq.s32.totalorder %s21, 1
      %p228 = scmp.ne.s32.totalorder %s223, %s225
      %p229 = scmp.eq.s32.totalorder %s21, 0
      %p230 = por %p228, %p229
      %p231 = scmp.ne.s32.totalorder %s223, %s225
      %p232 = scmp.eq.s32.totalorder %s26, 1
      %p233 = por %p231, %p232
      %p234 = scmp.ne.s32.totalorder %s225, %s226
      %p235 = scmp.eq.s32.totalorder %s26, 0
      %p236 = por %p234, %p235
      %p237 = scmp.ne.s32.totalorder %s225, %s226
      %p238 = scmp.eq.s32.totalorder %s27, 1
      %p239 = por %p237, %p238
      %p241 = scmp.ne.s32.totalorder %s226, %s240
      %p242 = scmp.eq.s32.totalorder %s27, 0
      %p243 = por %p241, %p242
      %s245 = sadd.s32 %s244, 1
      %p248 = scmp.eq.s32.totalorder %s21, 1
      %p249 = scmp.ne.s32.totalorder %s244, %s246
      %p250 = scmp.eq.s32.totalorder %s21, 0
      %p251 = por %p249, %p250
      %p252 = scmp.ne.s32.totalorder %s244, %s246
      %p253 = scmp.eq.s32.totalorder %s26, 1
      %p254 = por %p252, %p253
      %p255 = scmp.ne.s32.totalorder %s246, %s247
      %p256 = scmp.eq.s32.totalorder %s26, 0
      %p257 = por %p255, %p256
      %p258 = scmp.ne.s32.totalorder %s246, %s247
      %p259 = scmp.eq.s32.totalorder %s27, 1
      %p260 = por %p258, %p259
      %p262 = scmp.ne.s32.totalorder %s247, %s261
      %p263 = scmp.eq.s32.totalorder %s27, 0
      %p264 = por %p262, %p263
      %s266 = sadd.s32 %s265, 1
      %p269 = scmp.eq.s32.totalorder %s21, 1
      %p270 = scmp.ne.s32.totalorder %s265, %s267
      %p271 = scmp.eq.s32.totalorder %s21, 0
      %p272 = por %p270, %p271
      %p273 = scmp.ne.s32.totalorder %s265, %s267
      %p274 = scmp.eq.s32.totalorder %s26, 1
      %p275 = por %p273, %p274
      %p276 = scmp.ne.s32.totalorder %s267, %s268
      %p277 = scmp.eq.s32.totalorder %s26, 0
      %p278 = por %p276, %p277
      %p279 = scmp.ne.s32.totalorder %s267, %s268
      %p280 = scmp.eq.s32.totalorder %s27, 1
      %p281 = por %p279, %p280
      %p283 = scmp.ne.s32.totalorder %s268, %s282
      %p284 = scmp.eq.s32.totalorder %s27, 0
      %p285 = por %p283, %p284
      %s286 = ssub.s32 %s21, %s28
      %p287 = scmp.eq.s32.totalorder %s286, 0
      %s289 = sadd.s32 %s288, 1
      %s290 = scalar_select %p287, %s288, %s289
      %p293 = pneg %p287
      %p294 = scmp.eq.s32.totalorder %s21, 1
      %p295 = por %p293, %p294
      %p296 = scmp.ne.s32.totalorder %s288, %s291
      %p297 = scmp.eq.s32.totalorder %s21, 0
      %p298 = por %p296, %p297
      %p299 = scmp.ne.s32.totalorder %s288, %s291
      %p300 = scmp.eq.s32.totalorder %s26, 1
      %p301 = por %p299, %p300
      %p302 = scmp.ne.s32.totalorder %s291, %s292
      %p303 = scmp.eq.s32.totalorder %s26, 0
      %p304 = por %p302, %p303
      %p305 = scmp.ne.s32.totalorder %s291, %s292
      %p306 = scmp.eq.s32.totalorder %s27, 1
      %p307 = por %p305, %p306
      %p309 = scmp.ne.s32.totalorder %s292, %s308
      %p310 = scmp.eq.s32.totalorder %s27, 0
      %p311 = por %p309, %p310
      %p312 = scmp.le.s32.totalorder 1, %s21
      %p313 = scmp.lt.s32.totalorder %s21, 3
      %p314 = pnand %p312, %p313
      %p315 = pneg %p314
      // Predicated region
      $region9: #{tpu_custom_call.1} parent=5 // pred_check
        _
      $region10: #{tpu_custom_call.1} parent=5 // pred_check_branch
        %317 = sbr.rel (%p314) target = $region12
      $region11: #{tpu_custom_call.1} parent=5 // pred_region
        %s318 = ssub.s32 %s21, 1
        // Predicated region
        $region13: #{tpu_custom_call.1} parent=11 // pred_check
          %p319 = pneg %p68
        $region14: #{tpu_custom_call.1} parent=11 // pred_check_branch
          %321 = sbr.rel (%p319) target = $region16
        $region15: #{tpu_custom_call.1} parent=11 // pred_region
          _
        $region16: #{tpu_custom_call.1} parent=11 // pred_fallthru
          _
        // Predicated region
        $region17: #{tpu_custom_call.1} parent=11 // pred_check
          %p322 = pneg %p89
        $region18: #{tpu_custom_call.1} parent=11 // pred_check_branch
          %324 = sbr.rel (%p322) target = $region20
        $region19: #{tpu_custom_call.1} parent=11 // pred_region
          _
        $region20: #{tpu_custom_call.1} parent=11 // pred_fallthru
          _
        // Predicated region
        $region21: #{tpu_custom_call.1} parent=11 // pred_check
          %p325 = pneg %p110
        $region22: #{tpu_custom_call.1} parent=11 // pred_check_branch
          %327 = sbr.rel (%p325) target = $region24
        $region23: #{tpu_custom_call.1} parent=11 // pred_region
          _
        $region24: #{tpu_custom_call.1} parent=11 // pred_fallthru
          _
        // Predicated region
        $region25: #{tpu_custom_call.1} parent=11 // pred_check
          %p328 = pneg %p131
        $region26: #{tpu_custom_call.1} parent=11 // pred_check_branch
          %330 = sbr.rel (%p328) target = $region28
        $region27: #{tpu_custom_call.1} parent=11 // pred_region
          _
        $region28: #{tpu_custom_call.1} parent=11 // pred_fallthru
          _
        // Predicated region
        $region29: #{tpu_custom_call.1} parent=11 // pred_check
          %p331 = pneg %p152
        $region30: #{tpu_custom_call.1} parent=11 // pred_check_branch
          %333 = sbr.rel (%p331) target = $region32
        $region31: #{tpu_custom_call.1} parent=11 // pred_region
          _
        $region32: #{tpu_custom_call.1} parent=11 // pred_fallthru
          _
        // Predicated region
        $region33: #{tpu_custom_call.1} parent=11 // pred_check
          %p334 = pneg %p173
        $region34: #{tpu_custom_call.1} parent=11 // pred_check_branch
          %336 = sbr.rel (%p334) target = $region36
        $region35: #{tpu_custom_call.1} parent=11 // pred_region
          _
        $region36: #{tpu_custom_call.1} parent=11 // pred_fallthru
          _
        // Predicated region
        $region37: #{tpu_custom_call.1} parent=11 // pred_check
          %p337 = pneg %p194
        $region38: #{tpu_custom_call.1} parent=11 // pred_check_branch
          %339 = sbr.rel (%p337) target = $region40
        $region39: #{tpu_custom_call.1} parent=11 // pred_region
          _
        $region40: #{tpu_custom_call.1} parent=11 // pred_fallthru
          _
        // Predicated region
        $region41: #{tpu_custom_call.1} parent=11 // pred_check
          %p340 = pneg %p215
        $region42: #{tpu_custom_call.1} parent=11 // pred_check_branch
          %342 = sbr.rel (%p340) target = $region44
        $region43: #{tpu_custom_call.1} parent=11 // pred_region
          _
        $region44: #{tpu_custom_call.1} parent=11 // pred_fallthru
          _
        // Predicated region
        $region45: #{tpu_custom_call.1} parent=11 // pred_check
          %p343 = pneg %p236
        $region46: #{tpu_custom_call.1} parent=11 // pred_check_branch
          %345 = sbr.rel (%p343) target = $region48
        $region47: #{tpu_custom_call.1} parent=11 // pred_region
          _
        $region48: #{tpu_custom_call.1} parent=11 // pred_fallthru
          _
        // Predicated region
        $region49: #{tpu_custom_call.1} parent=11 // pred_check
          %p346 = pneg %p257
        $region50: #{tpu_custom_call.1} parent=11 // pred_check_branch
          %348 = sbr.rel (%p346) target = $region52
        $region51: #{tpu_custom_call.1} parent=11 // pred_region
          _
        $region52: #{tpu_custom_call.1} parent=11 // pred_fallthru
          _
        // Predicated region
        $region53: #{tpu_custom_call.1} parent=11 // pred_check
          %p349 = pneg %p278
        $region54: #{tpu_custom_call.1} parent=11 // pred_check_branch
          %351 = sbr.rel (%p349) target = $region56
        $region55: #{tpu_custom_call.1} parent=11 // pred_region
          _
        $region56: #{tpu_custom_call.1} parent=11 // pred_fallthru
          _
      $region12: #{tpu_custom_call.1} parent=5 // pred_fallthru
        _
      %p352 = scmp.lt.s32.totalorder %s21, 2
      // Predicated region
      $region57: #{tpu_custom_call.1} parent=5 // pred_check
        %p353 = pneg %p352
      $region58: #{tpu_custom_call.1} parent=5 // pred_check_branch
        %355 = sbr.rel (%p353) target = $region60
      $region59: #{tpu_custom_call.1} parent=5 // pred_region
        // Predicated region
        $region61: #{tpu_custom_call.1} parent=59 // pred_check
          %p356 = pneg %p41
        $region62: #{tpu_custom_call.1} parent=59 // pred_check_branch
          %358 = sbr.rel (%p356) target = $region64
        $region63: #{tpu_custom_call.1} parent=59 // pred_region
          %p359 = scmp.lt.s32.totalorder %s21, 1
          %s360 = scalar_select %p359, %s21, 1
          %s361 = smul.addr %s360, 2
          %s362 = smul.addr %s361, 8
          %s363 = scalar_lea.vmem %s0, %s362
        $region64: #{tpu_custom_call.1} parent=59 // pred_fallthru
          _
      $region60: #{tpu_custom_call.1} parent=5 // pred_fallthru
        _
      %p364 = scmp.le.s32.totalorder 1, %s21
      %p365 = scmp.lt.s32.totalorder %s21, 3
      %p366 = pnand %p364, %p365
      %p367 = pneg %p366
      // Predicated region
      $region65: #{tpu_custom_call.1} parent=5 // pred_check
        _
      $region66: #{tpu_custom_call.1} parent=5 // pred_check_branch
        %369 = sbr.rel (%p366) target = $region68
      $region67: #{tpu_custom_call.1} parent=5 // pred_region
        %s370 = ssub.s32 %s21, 1
        %p371 = scmp.lt.s32.totalorder %s26, 1
        %s372 = scalar_select %p371, %s26, 1
        %s373 = smul.addr %s372, 2
        %s374 = smul.addr %s373, 8
        %s375 = scalar_lea.vmem %s0, %s374
        %p376 = pneg %p47
        %p377 = pneg %p44
        %p378 = pneg %p68
        %p379 = pneg %p65
        %p380 = pneg %p89
        %p381 = pneg %p86
        %p382 = pneg %p110
        %p383 = pneg %p107
        %p384 = pneg %p131
        %p385 = pneg %p128
        %p386 = pneg %p152
        %p387 = pneg %p149
        %p388 = pneg %p173
        %p389 = pneg %p170
        %p390 = pneg %p194
        %p391 = pneg %p191
        %p392 = pneg %p215
        %p393 = pneg %p212
        %p394 = pneg %p236
        %p395 = pneg %p233
        %p396 = pneg %p257
        %p397 = pneg %p254
        %p398 = pneg %p278
        %p399 = pneg %p275
        %p400 = pneg %p304
        %p401 = pneg %p301
        %s402 = sand.u32 %s291, 1
        %s403 = scalar_lea.sflag [#allocation3], %s402
        %s404 = sand.u32 %s291, 1
        %s405 = smul.addr %s404, 16
        %s406 = scalar_lea.vmem [#allocation2], %s405
        %p407 = scmp.lt.s32.totalorder %s26, 1
        %s408 = scalar_select %p407, %s26, 1
        %s409 = smul.addr %s408, 2
        %s410 = smul.addr %s409, 8
        %s411 = scalar_lea.vmem %s0, %s410
        %v413 = vld [vmem:[%s411] sm:$0xff]
        %v414 = vld [vmem:[%s411 + $0x8] sm:$0xff]
        %v415 = vld [vmem:[%s1] sm:$0x3]
        %v416 = vld [vmem:[%s2] sm:$0x3]
        %v417 = vadd.s32 %v415, 4294967295
        %vm418 = vcmp.ge.s32.totalorder %v417, 0
        %vm419 = vcmp.lt.s32.totalorder %v417, 16
        %vm420 = vmand %vm418, %vm419
        %v421 = vadd.s32 %v416, 4294967295
        %vm422 = vcmp.ge.s32.totalorder %v421, 0
        %vm423 = vmand %vm420, %vm422
        %vm424 = vcmp.lt.s32.totalorder %v421, 16
        %vm425 = vmand %vm423, %vm424
        %vm426 = vcmp.ge.s32.totalorder %v416, 0
        %vm427 = vmand %vm420, %vm426
        %vm428 = vcmp.lt.s32.totalorder %v416, 16
        %vm429 = vmand %vm427, %vm428
        %v430 = vadd.s32 %v416, 1
        %vm431 = vcmp.ge.s32.totalorder %v430, 0
        %vm432 = vmand %vm420, %vm431
        %vm433 = vcmp.lt.s32.totalorder %v430, 16
        %vm434 = vmand %vm432, %vm433
        %vm435 = vcmp.ge.s32.totalorder %v415, 0
        %vm436 = vcmp.lt.s32.totalorder %v415, 16
        %vm437 = vmand %vm435, %vm436
        %vm438 = vmand %vm437, %vm422
        %vm439 = vmand %vm438, %vm424
        %vm440 = vmand %vm437, %vm426
        %vm441 = vmand %vm440, %vm428
        %vm442 = vmand %vm437, %vm431
        %vm443 = vmand %vm442, %vm433
        %v444 = vadd.s32 %v415, 1
        %vm445 = vcmp.ge.s32.totalorder %v444, 0
        %vm446 = vcmp.lt.s32.totalorder %v444, 16
        %vm447 = vmand %vm445, %vm446
        %vm448 = vmand %vm447, %vm422
        %vm449 = vmand %vm448, %vm424
        %vm450 = vmand %vm447, %vm426
        %vm451 = vmand %vm450, %vm428
        %vm452 = vmand %vm447, %vm431
        %vm453 = vmand %vm452, %vm433
        %454 = vrot.lane.b32.xlu0 %v413, 17
        %v455 = vpop.permute.xlu0 %454
        %456 = vrot.lane.b32.xlu0 %v414, 17
        %v457 = vpop.permute.xlu0 %456
        %v458 = vlaneseq
        %v459 = vand.u32 %v458, 127
        %vm460 = vcmp.lt.s32.totalorder %v459, 17
        %v461 = vsel %vm460, %v455, %v457
        %v462 = vsel %vm460, %v457, %v455
        %v463 = vsel %vm425, 1, 0
        %v464 = vlaneseq
        %v465 = vshrl.u32 %v464, 7
        %v466 = vsub.s32 0, %v465
        %v467 = vrot.slane %v463, %v466
        %v468 = vlaneseq
        %v469 = vshrl.u32 %v468, 7
        %v470 = vsub.s32 1, %v469
        %v471 = vrot.slane %v463, %v470
        %vm472 = vcmp.eq.s32.totalorder %v467, 1
        %vm473 = vcmp.eq.s32.totalorder %v471, 1
        %v474 = vsel %vm472, %v462, 0.0
        %v475 = vsel %vm473, %v461, 0.0
        %476 = vrot.lane.b32.xlu0 %v413, 16
        %v477 = vpop.permute.xlu0 %476
        %478 = vrot.lane.b32.xlu0 %v414, 16
        %v479 = vpop.permute.xlu0 %478
        %vm480 = vcmp.lt.s32.totalorder %v459, 16
        %v481 = vsel %vm480, %v477, %v479
        %v482 = vsel %vm480, %v479, %v477
        %v483 = vsel %vm429, 1, 0
        %v484 = vlaneseq
        %v485 = vshrl.u32 %v484, 7
        %v486 = vsub.s32 0, %v485
        %v487 = vrot.slane %v483, %v486
        %v488 = vlaneseq
        %v489 = vshrl.u32 %v488, 7
        %v490 = vsub.s32 1, %v489
        %v491 = vrot.slane %v483, %v490
        %vm492 = vcmp.eq.s32.totalorder %v487, 1
        %vm493 = vcmp.eq.s32.totalorder %v491, 1
        %v494 = vsel %vm492, %v482, 0.0
        %v495 = vsel %vm493, %v481, 0.0
        %496 = vrot.lane.b32.xlu0 %v413, 15
        %v497 = vpop.permute.xlu0 %496
        %498 = vrot.lane.b32.xlu0 %v414, 15
        %v499 = vpop.permute.xlu0 %498
        %vm500 = vcmp.lt.s32.totalorder %v459, 15
        %v501 = vsel %vm500, %v497, %v499
        %v502 = vsel %vm500, %v499, %v497
        %v503 = vsel %vm434, 1, 0
        %v504 = vlaneseq
        %v505 = vshrl.u32 %v504, 7
        %v506 = vsub.s32 0, %v505
        %v507 = vrot.slane %v503, %v506
        %v508 = vlaneseq
        %v509 = vshrl.u32 %v508, 7
        %v510 = vsub.s32 1, %v509
        %v511 = vrot.slane %v503, %v510
        %vm512 = vcmp.eq.s32.totalorder %v507, 1
        %vm513 = vcmp.eq.s32.totalorder %v511, 1
        %v514 = vsel %vm512, %v502, 0.0
        %v515 = vsel %vm513, %v501, 0.0
        %516 = vrot.lane.b32.xlu0 %v413, 1
        %v517 = vpop.permute.xlu0 %516
        %518 = vrot.lane.b32.xlu0 %v414, 1
        %v519 = vpop.permute.xlu0 %518
        %vm520 = vcmp.lt.s32.totalorder %v459, 1
        %v521 = vsel %vm520, %v517, %v519
        %v522 = vsel %vm520, %v519, %v517
        %v523 = vsel %vm439, 1, 0
        %v524 = vlaneseq
        %v525 = vshrl.u32 %v524, 7
        %v526 = vsub.s32 0, %v525
        %v527 = vrot.slane %v523, %v526
        %v528 = vlaneseq
        %v529 = vshrl.u32 %v528, 7
        %v530 = vsub.s32 1, %v529
        %v531 = vrot.slane %v523, %v530
        %vm532 = vcmp.eq.s32.totalorder %v527, 1
        %vm533 = vcmp.eq.s32.totalorder %v531, 1
        %v534 = vsel %vm532, %v522, 0.0
        %v535 = vsel %vm533, %v521, 0.0
        %v536 = vsel %vm441, 1, 0
        %v537 = vlaneseq
        %v538 = vshrl.u32 %v537, 7
        %v539 = vsub.s32 0, %v538
        %v540 = vrot.slane %v536, %v539
        %v541 = vlaneseq
        %v542 = vshrl.u32 %v541, 7
        %v543 = vsub.s32 1, %v542
        %v544 = vrot.slane %v536, %v543
        %vm545 = vcmp.eq.s32.totalorder %v540, 1
        %vm546 = vcmp.eq.s32.totalorder %v544, 1
        %v547 = vsel %vm545, %v413, 0.0
        %v548 = vsel %vm546, %v414, 0.0
        %549 = vrot.lane.b32.xlu0 %v413, 127
        %v550 = vpop.permute.xlu0 %549
        %551 = vrot.lane.b32.xlu0 %v414, 127
        %v552 = vpop.permute.xlu0 %551
        %vm553 = vcmp.lt.s32.totalorder %v459, 127
        %v554 = vsel %vm553, %v550, %v552
        %v555 = vsel %vm553, %v552, %v550
        %v556 = vsel %vm443, 1, 0
        %v557 = vlaneseq
        %v558 = vshrl.u32 %v557, 7
        %v559 = vsub.s32 0, %v558
        %v560 = vrot.slane %v556, %v559
        %v561 = vlaneseq
        %v562 = vshrl.u32 %v561, 7
        %v563 = vsub.s32 1, %v562
        %v564 = vrot.slane %v556, %v563
        %vm565 = vcmp.eq.s32.totalorder %v560, 1
        %vm566 = vcmp.eq.s32.totalorder %v564, 1
        %v567 = vsel %vm565, %v554, 0.0
        %v568 = vsel %vm566, %v555, 0.0
        %569 = vrot.lane.b32.xlu0 %v413, 113
        %v570 = vpop.permute.xlu0 %569
        %571 = vrot.lane.b32.xlu0 %v414, 113
        %v572 = vpop.permute.xlu0 %571
        %vm573 = vcmp.lt.s32.totalorder %v459, 113
        %v574 = vsel %vm573, %v570, %v572
        %v575 = vsel %vm573, %v572, %v570
        %v576 = vsel %vm449, 1, 0
        %v577 = vlaneseq
        %v578 = vshrl.u32 %v577, 7
        %v579 = vsub.s32 0, %v578
        %v580 = vrot.slane %v576, %v579
        %v581 = vlaneseq
        %v582 = vshrl.u32 %v581, 7
        %v583 = vsub.s32 1, %v582
        %v584 = vrot.slane %v576, %v583
        %vm585 = vcmp.eq.s32.totalorder %v580, 1
        %vm586 = vcmp.eq.s32.totalorder %v584, 1
        %v587 = vsel %vm585, %v574, 0.0
        %v588 = vsel %vm586, %v575, 0.0
        %589 = vrot.lane.b32.xlu0 %v413, 112
        %v590 = vpop.permute.xlu0 %589
        %591 = vrot.lane.b32.xlu0 %v414, 112
        %v592 = vpop.permute.xlu0 %591
        %vm593 = vcmp.lt.s32.totalorder %v459, 112
        %v594 = vsel %vm593, %v590, %v592
        %v595 = vsel %vm593, %v592, %v590
        %v596 = vsel %vm451, 1, 0
        %v597 = vlaneseq
        %v598 = vshrl.u32 %v597, 7
        %v599 = vsub.s32 0, %v598
        %v600 = vrot.slane %v596, %v599
        %v601 = vlaneseq
        %v602 = vshrl.u32 %v601, 7
        %v603 = vsub.s32 1, %v602
        %v604 = vrot.slane %v596, %v603
        %vm605 = vcmp.eq.s32.totalorder %v600, 1
        %vm606 = vcmp.eq.s32.totalorder %v604, 1
        %v607 = vsel %vm605, %v594, 0.0
        %v608 = vsel %vm606, %v595, 0.0
        %609 = vrot.lane.b32.xlu0 %v413, 111
        %v610 = vpop.permute.xlu0 %609
        %611 = vrot.lane.b32.xlu0 %v414, 111
        %v612 = vpop.permute.xlu0 %611
        %vm613 = vcmp.lt.s32.totalorder %v459, 111
        %v614 = vsel %vm613, %v610, %v612
        %v615 = vsel %vm613, %v612, %v610
        %v616 = vsel %vm453, 1, 0
        %v617 = vlaneseq
        %v618 = vshrl.u32 %v617, 7
        %v619 = vsub.s32 0, %v618
        %v620 = vrot.slane %v616, %v619
        %v621 = vlaneseq
        %v622 = vshrl.u32 %v621, 7
        %v623 = vsub.s32 1, %v622
        %v624 = vrot.slane %v616, %v623
        %vm625 = vcmp.eq.s32.totalorder %v620, 1
        %vm626 = vcmp.eq.s32.totalorder %v624, 1
        %v627 = vsel %vm625, %v614, 0.0
        %v628 = vsel %vm626, %v615, 0.0
        %v629 = vpack.c.bf16 %v494, %v474
        %v630 = vpack.c.bf16 %v495, %v475
        %v631 = vpack.c.bf16 %v534, %v514
        %v632 = vpack.c.bf16 %v535, %v515
        %v633 = vpack.c.bf16 %v567, %v547
        %v634 = vpack.c.bf16 %v568, %v548
        %v635 = vpack.c.bf16 %v607, %v587
        %v636 = vpack.c.bf16 %v608, %v588
        %v637 = vpack.c.bf16 %v627, %v627
        %v638 = vpack.c.bf16 %v628, %v628
        %v639 = vld [vmem:[%s3] sm:$0xf]
        %vm640 = vcmask 588800
        %v642 = vsel %vm640, %v639, 0
        %vm644 = vcmask 1043456
        %v646 = vsel %vm644, %v637, 0
        %v649 = vsel %vm644, %v638, 0
        %651 = vmatprep.subr.bf16.mxu0 %v630
        %652 = vmatpush1.bf16.msra.mxu0 %v629
        %653 = vmatprep.subr.bf16.mxu0 %v632
        %654 = vmatpush1.bf16.msra.mxu0 %v631
        %655 = vmatprep.subr.bf16.mxu0 %v634
        %656 = vmatpush1.bf16.msra.mxu0 %v633
        %657 = vmatprep.subr.bf16.mxu0 %v636
        %658 = vmatpush1.bf16.msra.mxu0 %v635
        %659 = vmatprep.subr.bf16.mxu0 %v649
        %660 = vmatpush1.bf16.msra.mxu0 %v646
        %661 = vmatprep.subr.bf16.mxu0 0
        %662 = vmatpush1.bf16.msra.mxu0 0
        %663 = vmatprep.subr.bf16.mxu0 0
        %664 = vmatpush1.bf16.msra.mxu0 0
        %665 = vmatprep.subr.bf16.mxu0 0
        %666 = vmatpush1.bf16.msra.mxu0 0
        %667 = vmatprep.subr.bf16.mxu0 0
        %668 = vmatpush1.bf16.msra.mxu0 0
        %669 = vmatprep.subr.bf16.mxu0 0
        %670 = vmatpush1.bf16.msra.mxu0 0
        %671 = vmatprep.subr.bf16.mxu0 0
        %672 = vmatpush1.bf16.msra.mxu0 0
        %673 = vmatprep.subr.bf16.mxu0 0
        %674 = vmatpush1.bf16.msra.mxu0 0
        %675 = vmatprep.subr.bf16.mxu0 0
        %676 = vmatpush1.bf16.msra.mxu0 0
        %677 = vmatprep.subr.bf16.mxu0 0
        %678 = vmatpush1.bf16.msra.mxu0 0
        %679 = vmatprep.subr.bf16.mxu0 0
        %680 = vmatpush1.bf16.msra.mxu0 0
        %681 = vmatprep.subr.bf16.mxu0 0
        %682 = vmatpush1.bf16.msra.mxu0 0
        %683 = vmatprep.mubr.bf16.mxu0 0
        %684 = vmatmul.mubr.bf16.gmra.mrb[0].mxu0 %v642
        %v685 = vpop.f32.mrb[0].mxu0
        %v686 = vadd.f32 0.0, %v685
        %v687 = vpop.f32.mrb[0].mxu0
        %v688 = vadd.f32 0.0, %v687
        %v689 = vpop.f32.mrb[0].mxu0
        %v690 = vpop.f32.mrb[0].mxu0
        %691 = vdwg.mxu0
        %v692 = vld [vmem:[%s4] sm:$0xff]
        %694 = vset.pattern.permute.xlu0 0
        %695 = vperm.xlu0 %694, %v692
        %v696 = vpop.permute.xlu0 %695
        %v698 = vmul.f32 %v686, %v696
        %v699 = vmul.f32 %v688, %v696
        %v700 = vld [vmem:[%s5] sm:$0xff]
        %702 = vset.pattern.permute.xlu0 0
        %703 = vperm.xlu0 %702, %v700
        %v704 = vpop.permute.xlu0 %703
        %v706 = vadd.f32 %v698, %v704
        %v707 = vadd.f32 %v699, %v704
        %v708 = vmax.f32 %v706, 0.0
        %v709 = vmax.f32 %v707, 0.0
        %710 = vrot.lane.b32.xlu0 %v708, 17
        %v711 = vpop.permute.xlu0 %710
        %712 = vrot.lane.b32.xlu0 %v709, 17
        %v713 = vpop.permute.xlu0 %712
        %v714 = vsel %vm460, %v711, %v713
        %v715 = vsel %vm460, %v713, %v711
        %v716 = vsel %vm472, %v715, 0.0
        %v717 = vsel %vm473, %v714, 0.0
        %718 = vrot.lane.b32.xlu0 %v708, 16
        %v719 = vpop.permute.xlu0 %718
        %720 = vrot.lane.b32.xlu0 %v709, 16
        %v721 = vpop.permute.xlu0 %720
        %v722 = vsel %vm480, %v719, %v721
        %v723 = vsel %vm480, %v721, %v719
        %v724 = vsel %vm492, %v723, 0.0
        %v725 = vsel %vm493, %v722, 0.0
        %726 = vrot.lane.b32.xlu0 %v708, 15
        %v727 = vpop.permute.xlu0 %726
        %728 = vrot.lane.b32.xlu0 %v709, 15
        %v729 = vpop.permute.xlu0 %728
        %v730 = vsel %vm500, %v727, %v729
        %v731 = vsel %vm500, %v729, %v727
        %v732 = vsel %vm512, %v731, 0.0
        %v733 = vsel %vm513, %v730, 0.0
        %734 = vrot.lane.b32.xlu0 %v708, 1
        %v735 = vpop.permute.xlu0 %734
        %736 = vrot.lane.b32.xlu0 %v709, 1
        %v737 = vpop.permute.xlu0 %736
        %v738 = vsel %vm520, %v735, %v737
        %v739 = vsel %vm520, %v737, %v735
        %v740 = vsel %vm532, %v739, 0.0
        %v741 = vsel %vm533, %v738, 0.0
        %v742 = vsel %vm545, %v708, 0.0
        %v743 = vsel %vm546, %v709, 0.0
        %744 = vrot.lane.b32.xlu0 %v708, 127
        %v745 = vpop.permute.xlu0 %744
        %746 = vrot.lane.b32.xlu0 %v709, 127
        %v747 = vpop.permute.xlu0 %746
        %v748 = vsel %vm553, %v745, %v747
        %v749 = vsel %vm553, %v747, %v745
        %v750 = vsel %vm565, %v748, 0.0
        %v751 = vsel %vm566, %v749, 0.0
        %752 = vrot.lane.b32.xlu0 %v708, 113
        %v753 = vpop.permute.xlu0 %752
        %754 = vrot.lane.b32.xlu0 %v709, 113
        %v755 = vpop.permute.xlu0 %754
        %v756 = vsel %vm573, %v753, %v755
        %v757 = vsel %vm573, %v755, %v753
        %v758 = vsel %vm585, %v756, 0.0
        %v759 = vsel %vm586, %v757, 0.0
        %760 = vrot.lane.b32.xlu0 %v708, 112
        %v761 = vpop.permute.xlu0 %760
        %762 = vrot.lane.b32.xlu0 %v709, 112
        %v763 = vpop.permute.xlu0 %762
        %v764 = vsel %vm593, %v761, %v763
        %v765 = vsel %vm593, %v763, %v761
        %v766 = vsel %vm605, %v764, 0.0
        %v767 = vsel %vm606, %v765, 0.0
        %768 = vrot.lane.b32.xlu0 %v708, 111
        %v769 = vpop.permute.xlu0 %768
        %770 = vrot.lane.b32.xlu0 %v709, 111
        %v771 = vpop.permute.xlu0 %770
        %v772 = vsel %vm613, %v769, %v771
        %v773 = vsel %vm613, %v771, %v769
        %v774 = vsel %vm625, %v772, 0.0
        %v775 = vsel %vm626, %v773, 0.0
        %v776 = vpack.c.bf16 %v724, %v716
        %v777 = vpack.c.bf16 %v725, %v717
        %v778 = vpack.c.bf16 %v740, %v732
        %v779 = vpack.c.bf16 %v741, %v733
        %v780 = vpack.c.bf16 %v750, %v742
        %v781 = vpack.c.bf16 %v751, %v743
        %v782 = vpack.c.bf16 %v766, %v758
        %v783 = vpack.c.bf16 %v767, %v759
        %v784 = vpack.c.bf16 %v774, %v774
        %v785 = vpack.c.bf16 %v775, %v775
        %v786 = vld [vmem:[%s6] sm:$0xf]
        %v788 = vsel %vm640, %v786, 0
        %v791 = vsel %vm644, %v784, 0
        %v794 = vsel %vm644, %v785, 0
        %796 = vmatprep.subr.bf16.mxu0 %v777
        %797 = vmatpush1.bf16.msra.mxu0 %v776
        %798 = vmatprep.subr.bf16.mxu0 %v779
        %799 = vmatpush1.bf16.msra.mxu0 %v778
        %800 = vmatprep.subr.bf16.mxu0 %v781
        %801 = vmatpush1.bf16.msra.mxu0 %v780
        %802 = vmatprep.subr.bf16.mxu0 %v783
        %803 = vmatpush1.bf16.msra.mxu0 %v782
        %804 = vmatprep.subr.bf16.mxu0 %v794
        %805 = vmatpush1.bf16.msra.mxu0 %v791
        %806 = vmatprep.subr.bf16.mxu0 0
        %807 = vmatpush1.bf16.msra.mxu0 0
        %808 = vmatprep.subr.bf16.mxu0 0
        %809 = vmatpush1.bf16.msra.mxu0 0
        %810 = vmatprep.subr.bf16.mxu0 0
        %811 = vmatpush1.bf16.msra.mxu0 0
        %812 = vmatprep.subr.bf16.mxu0 0
        %813 = vmatpush1.bf16.msra.mxu0 0
        %814 = vmatprep.subr.bf16.mxu0 0
        %815 = vmatpush1.bf16.msra.mxu0 0
        %816 = vmatprep.subr.bf16.mxu0 0
        %817 = vmatpush1.bf16.msra.mxu0 0
        %818 = vmatprep.subr.bf16.mxu0 0
        %819 = vmatpush1.bf16.msra.mxu0 0
        %820 = vmatprep.subr.bf16.mxu0 0
        %821 = vmatpush1.bf16.msra.mxu0 0
        %822 = vmatprep.subr.bf16.mxu0 0
        %823 = vmatpush1.bf16.msra.mxu0 0
        %824 = vmatprep.subr.bf16.mxu0 0
        %825 = vmatpush1.bf16.msra.mxu0 0
        %826 = vmatprep.subr.bf16.mxu0 0
        %827 = vmatpush1.bf16.msra.mxu0 0
        %828 = vmatprep.mubr.bf16.mxu0 0
        %829 = vmatmul.mubr.bf16.gmra.mrb[0].mxu0 %v788
        %v830 = vpop.f32.mrb[0].mxu0
        %v831 = vadd.f32 0.0, %v830
        %v832 = vpop.f32.mrb[0].mxu0
        %v833 = vadd.f32 0.0, %v832
        %v834 = vpop.f32.mrb[0].mxu0
        %v835 = vpop.f32.mrb[0].mxu0
        %836 = vdwg.mxu0
        %v837 = vld [vmem:[%s7] sm:$0xff]
        %839 = vset.pattern.permute.xlu0 0
        %840 = vperm.xlu0 %839, %v837
        %v841 = vpop.permute.xlu0 %840
        %v843 = vmul.f32 %v831, %v841
        %v844 = vmul.f32 %v833, %v841
        %v845 = vld [vmem:[%s8] sm:$0xff]
        %847 = vset.pattern.permute.xlu0 0
        %848 = vperm.xlu0 %847, %v845
        %v849 = vpop.permute.xlu0 %848
        %v851 = vadd.f32 %v843, %v849
        %v852 = vadd.f32 %v844, %v849
        %v853 = vld [vmem:[%s9] sm:$0xf]
        %v854 = vpack.c.bf16 %v413, %v413
        %v855 = vpack.c.bf16 %v414, %v414
        %vm856 = vcmask 64512
        %v858 = vsel %vm856, %v853, 0
        %v861 = vsel %vm644, %v854, 0
        %v864 = vsel %vm644, %v855, 0
        %866 = vmatprep.subr.bf16.mxu0 %v864
        %867 = vmatpush1.bf16.msra.mxu0 %v861
        %868 = vmatprep.subr.bf16.mxu0 0
        %869 = vmatpush1.bf16.msra.mxu0 0
        %870 = vmatprep.subr.bf16.mxu0 0
        %871 = vmatpush1.bf16.msra.mxu0 0
        %872 = vmatprep.subr.bf16.mxu0 0
        %873 = vmatpush1.bf16.msra.mxu0 0
        %874 = vmatprep.subr.bf16.mxu0 0
        %875 = vmatpush1.bf16.msra.mxu0 0
        %876 = vmatprep.subr.bf16.mxu0 0
        %877 = vmatpush1.bf16.msra.mxu0 0
        %878 = vmatprep.subr.bf16.mxu0 0
        %879 = vmatpush1.bf16.msra.mxu0 0
        %880 = vmatprep.subr.bf16.mxu0 0
        %881 = vmatpush1.bf16.msra.mxu0 0
        %882 = vmatprep.subr.bf16.mxu0 0
        %883 = vmatpush1.bf16.msra.mxu0 0
        %884 = vmatprep.subr.bf16.mxu0 0
        %885 = vmatpush1.bf16.msra.mxu0 0
        %886 = vmatprep.subr.bf16.mxu0 0
        %887 = vmatpush1.bf16.msra.mxu0 0
        %888 = vmatprep.subr.bf16.mxu0 0
        %889 = vmatpush1.bf16.msra.mxu0 0
        %890 = vmatprep.subr.bf16.mxu0 0
        %891 = vmatpush1.bf16.msra.mxu0 0
        %892 = vmatprep.subr.bf16.mxu0 0
        %893 = vmatpush1.bf16.msra.mxu0 0
        %894 = vmatprep.subr.bf16.mxu0 0
        %895 = vmatpush1.bf16.msra.mxu0 0
        %896 = vmatprep.subr.bf16.mxu0 0
        %897 = vmatpush1.bf16.msra.mxu0 0
        %898 = vmatprep.mubr.bf16.mxu0 0
        %899 = vmatmul.mubr.bf16.gmra.mrb[0].mxu0 %v858
        %v900 = vpop.f32.mrb[0].mxu0
        %v901 = vadd.f32 0.0, %v900
        %v902 = vpop.f32.mrb[0].mxu0
        %v903 = vadd.f32 0.0, %v902
        %v904 = vpop.f32.mrb[0].mxu0
        %v905 = vpop.f32.mrb[0].mxu0
        %906 = vdwg.mxu0
        %v907 = vld [vmem:[%s10] sm:$0xff]
        %909 = vset.pattern.permute.xlu0 0
        %910 = vperm.xlu0 %909, %v907
        %v911 = vpop.permute.xlu0 %910
        %v913 = vmul.f32 %v901, %v911
        %v914 = vmul.f32 %v903, %v911
        %v915 = vld [vmem:[%s11] sm:$0xff]
        %917 = vset.pattern.permute.xlu0 0
        %918 = vperm.xlu0 %917, %v915
        %v919 = vpop.permute.xlu0 %918
        %v921 = vadd.f32 %v913, %v919
        %v922 = vadd.f32 %v914, %v919
        %v923 = vadd.f32 %v851, %v921
        %v924 = vadd.f32 %v852, %v922
        %v925 = vmax.f32 %v923, 0.0
        %v926 = vmax.f32 %v924, 0.0
        %927 = vst [vmem:[%s406] sm:$0xff] %v925
        %928 = vst [vmem:[%s406 + $0x8] sm:$0xff] %v926
        %s929 = sand.u32 %s291, 1
        %s930 = scalar_lea.sflag [#allocation3], %s929
        %s931 = sand.u32 %s291, 1
        %s932 = smul.addr %s931, 16
        %s933 = scalar_lea.vmem [#allocation2], %s932
        // Predicated region
        $region69: #{tpu_custom_call.1} parent=67 // pred_check
          %p934 = pneg %p301
        $region70: #{tpu_custom_call.1} parent=67 // pred_check_branch
          %936 = sbr.rel (%p934) target = $region72
        $region71: #{tpu_custom_call.1} parent=67 // pred_region
          %s938 = ssub.s32 256, 256
          %939 = vsyncadd %s930, %s938
          %s940 = smul.addr %s26, 2
          %s941 = smul.addr %s940, 128
          %s942 = scalar_lea.hbm %s12, %s941
          %s944 = sshll.u32 %s933, 4
          %s945 = int_to_ptr.vmem [resolvable:$true] %s944
          %947 = dma.vmem_to_hbm [thread:$0]  %s945, 256, %s942, %s930
        $region72: #{tpu_custom_call.1} parent=67 // pred_fallthru
          _
      $region68: #{tpu_custom_call.1} parent=5 // pred_fallthru
        _
      %p948 = scmp.le.s32.totalorder 2, %s21
      // Predicated region
      $region73: #{tpu_custom_call.1} parent=5 // pred_check
        %p949 = pneg %p948
      $region74: #{tpu_custom_call.1} parent=5 // pred_check_branch
        %951 = sbr.rel (%p949) target = $region76
      $region75: #{tpu_custom_call.1} parent=5 // pred_region
        %s952 = ssub.s32 %s21, 2
        // Predicated region
        $region77: #{tpu_custom_call.1} parent=75 // pred_check
          %p953 = pneg %p307
        $region78: #{tpu_custom_call.1} parent=75 // pred_check_branch
          %955 = sbr.rel (%p953) target = $region80
        $region79: #{tpu_custom_call.1} parent=75 // pred_region
          %s956 = sand.u32 %s292, 1
          %s957 = scalar_lea.sflag [#allocation3], %s956
          %s958 = sand.u32 %s292, 1
          %s959 = smul.addr %s958, 16
          %s960 = scalar_lea.vmem [#allocation2], %s959
          %961 = dma.done %s957, 256
        $region80: #{tpu_custom_call.1} parent=75 // pred_fallthru
          _
      $region76: #{tpu_custom_call.1} parent=5 // pred_fallthru
        _
    $region6: #{tpu_custom_call.1} parent=1 // loop_footer
      %s25 = sadd.s32 1, %s21
    $region7: #{tpu_custom_call.1} parent=1 // loop_footer_branch
      %20 = sbr.rel target = $region3
    $region8: #{tpu_custom_call.1} parent=1 // loop_exit
      _
    %962 = vsyncpa [#allocation3], 1
    %s963 = scalar_lea.sflag [#allocation3], 1
    %964 = vsyncpa %s963, 1

</llo_original>
